<compile_context>
chip_gen: v5e
topology: v5e:2x2
jax: 0.10.0
libtpu: 0.0.40
codegen_flags: <defaults>
</compile_context>

<pallas_src>
import math

import jax
import jax.numpy as jnp
from jax import lax
from jax.experimental import pallas as pl
from jax.experimental.pallas import tpu as pltpu

# Synthetic config (the original reads these from `cfg`)
cfg = {
    "N_WINDOWS": 8,          # == seq_len (must match for the MLP to type-check)
    "DROPOUT": 0.2,
    "N_HEADS": 2,
    "N_ENC_LAYERS": 1,
    "N_MAX_CONV_FILTERS": 16,
}

# Batch rows per grid step.  Multiple of 128 -> lane-dense MLP intermediates
# and a lane-dense (1, 1, TB) output store; ~5 MiB of VMEM per step with the
# lane-folded layout, so it fits every generation (v7x's 64 MiB included).
_MAX_BATCH_TILE = 128


def _round_up(a, m):
    return (a + m - 1) // m * m


# ---------------------------------------------------------------------------
# Pallas kernel
# ---------------------------------------------------------------------------
def cnn_fog_kernel(x_ref, w1e, w1o, b1e, b1o, w2e, w2o, b2e, b2o, w3, b3,
                   lw1, lb1, lw2, lb2, lw3, lb3, o_ref):
    """One batch tile.

    x_ref : (TB, NW, H*Cin) f32 -- (H, Cin) folded onto the lane axis.
    Conv weights are precomputed Toeplitz matmul matrices (bf16), with the
    output-H columns of conv1/conv2 pre-split into even/odd halves so the
    MaxPool2d((2,1)) is a prefix-sliced elementwise max.
    """
    tb, nw, _ = x_ref.shape
    p1_w = w2e.shape[0]            # H1p * C1  (pooled-1 lane width)
    p2_w = w3.shape[0]             # H2p * C2  (pooled-2 lane width)
    gap_w = w3.shape[1]            # H3 * C3   (conv3 output lane width)

    # bf16 MXU operands, f32 accumulation / elementwise (v5e has no bf16 VPU).
    x = x_ref[...].reshape(tb * nw, x_ref.shape[-1]).astype(jnp.bfloat16)

    def dense(a, w_ref, b_ref):
        return jnp.dot(a, w_ref[...], preferred_element_type=jnp.float32) + b_ref[...]

    # conv1 + ReLU (even / odd output-H columns), then MaxPool2d((2,1)):
    # max(relu(even_h), relu(odd_h)) over aligned lane groups (prefix slices).
    a1e = jnp.maximum(dense(x, w1e, b1e), 0.0)
    a1o = jnp.maximum(dense(x, w1o, b1o), 0.0)
    p1 = jnp.maximum(a1e[:, :p1_w], a1o[:, :p1_w]).astype(jnp.bfloat16)

    # conv2 + ReLU + MaxPool2d((2,1)), same scheme.
    a2e = jnp.maximum(dense(p1, w2e, b2e), 0.0)
    a2o = jnp.maximum(dense(p1, w2o, b2o), 0.0)
    p2 = jnp.maximum(a2e[:, :p2_w], a2o[:, :p2_w]).astype(jnp.bfloat16)

    # conv3 (no ReLU).
    z3 = dense(p2, w3, b3)                                    # (TB*NW, H3*C3) f32

    # AdaptiveAvgPool2d((1, NW)) over H then AvgPool1d(kernel=C3) over channels
    # == one mean over all H3*C3 lanes (equal group sizes).
    g = jnp.sum(z3.reshape(tb, nw, gap_w), axis=-1) * (1.0 / gap_w)   # (TB, NW)

    # --- MLP head: batch on lanes -> lane-dense (1, TB) store ---
    # TODO(synk): nn.Dropout layers are identity at inference; not modeled.
    z = jnp.dot(lw1[...], g.T, preferred_element_type=jnp.float32) + lb1[...]
    z = jnp.maximum(z, 0.0)                                   # (80, TB)
    z = jnp.dot(lw2[...], z, preferred_element_type=jnp.float32) + lb2[...]
    z = jnp.maximum(z, 0.0)                                   # (40, TB)
    z = jnp.dot(lw3[...], z, preferred_element_type=jnp.float32) + lb3[...]
    o_ref[...] = jax.nn.sigmoid(z).reshape(1, 1, tb)          # (1, 1, TB)


# ---------------------------------------------------------------------------
# Conv -> single-matmul weight construction (wrapper-side, plain JAX)
# ---------------------------------------------------------------------------
def _conv_as_matmul(w, h_in):
    """w: (Cout, Cin, 4, 1) PyTorch-layout Conv2d weight (kernel (4,1)).

    Returns M of shape (h_in*Cin, h_out*Cout) with
      M[(ho+k)*Cin + c, ho*Cout + o] = w[o, c, k, 0]
    so that a 'VALID' conv along H on an (rows, h_in*Cin) activation is a
    single matmul: out[:, ho*Cout + o] = sum_{k,c} a[:, (ho+k)*Cin+c] * w[o,c,k].
    """
    cout, cin, kh, _ = w.shape
    h_out = h_in - (kh - 1)
    wk = jnp.transpose(w[:, :, :, 0], (2, 1, 0))              # (kh, cin, cout)
    ho = jnp.arange(h_out)
    k = jnp.arange(kh)
    grp = ho[:, None] + k[None, :]                            # (h_out, kh)
    sel = jax.nn.one_hot(grp, h_in, dtype=w.dtype)            # (h_out, kh, h_in)
    m4 = jnp.einsum("hkg,kco->gcho", sel, wk)                 # (h_in, cin, h_out, cout)
    return m4.reshape(h_in * cin, h_out * cout)


def _split_even_odd(m, bias, h_out, cout):
    """Split the h_out*Cout columns into even / odd output-H positions so the
    following MaxPool2d((2,1)) is a prefix-sliced, lane-aligned max."""
    m3 = m.reshape(m.shape[0], h_out, cout)
    me = m3[:, 0::2, :].reshape(m.shape[0], -1).astype(jnp.bfloat16)
    mo = m3[:, 1::2, :].reshape(m.shape[0], -1).astype(jnp.bfloat16)
    be = jnp.tile(bias, ((h_out + 1) // 2,))[None, :]         # f32 (1, ne*cout)
    bo = jnp.tile(bias, (h_out // 2,))[None, :]                # f32 (1, no*cout)
    return me, mo, be, bo


# ---------------------------------------------------------------------------
# Parameters (deterministic, PyTorch-style uniform(-1/sqrt(fan_in), ...))
# ---------------------------------------------------------------------------
def init_params(key, in_channels, max_filters):
    ks = jax.random.split(key, 12)

    def unif(k, shape, fan_in):
        bound = 1.0 / math.sqrt(fan_in)
        return jax.random.uniform(k, shape, jnp.float32, -bound, bound)

    c1, c2, c3 = max_filters, max_filters // 2, max_filters // 4
    nw = cfg["N_WINDOWS"]
    return {
        # conv weights in PyTorch OIHW layout (Cout, Cin, 4, 1)
        "cw1": unif(ks[0], (c1, in_channels, 4, 1), in_channels * 4),
        "cb1": unif(ks[1], (c1,), in_channels * 4),
        "cw2": unif(ks[2], (c2, c1, 4, 1), c1 * 4),
        "cb2": unif(ks[3], (c2,), c1 * 4),
        "cw3": unif(ks[4], (c3, c2, 4, 1), c2 * 4),
        "cb3": unif(ks[5], (c3,), c2 * 4),
        # linear weights in PyTorch (out, in) layout
        "lw1": unif(ks[6], (80, nw), nw),
        "lb1": unif(ks[7], (80,), nw),
        "lw2": unif(ks[8], (40, 80), 80),
        "lb2": unif(ks[9], (40,), 80),
        "lw3": unif(ks[10], (1, 40), 40),
        "lb3": unif(ks[11], (1,), 40),
    }


# ---------------------------------------------------------------------------
# Wrapper
# ---------------------------------------------------------------------------
def _resident(arr):
    """Full-array VMEM block with a constant index map (fetched once)."""
    nd = arr.ndim
    return pl.BlockSpec(arr.shape, lambda i, _nd=nd: (0,) * _nd)


@jax.jit
def cnn_fog_forward(x, p):
    """x: (B, N_WINDOWS, H, C_in) -- same layout the PyTorch module receives."""
    B, NW, H, Cin = x.shape
    MF = p["cw1"].shape[0]
    C1, C2, C3 = MF, MF // 2, MF // 4
    H1 = H - 3
    H1p = H1 // 2
    H2 = H1p - 3
    H2p = H2 // 2
    H3 = H2p - 3

    # Batch tiling (TB multiple of 8; capped at 128 so the MLP / output lanes
    # are dense).  Batch is zero-padded to a whole grid; padded rows are
    # computed and sliced off (cheap, noted by the review as correct).
    TB = min(_MAX_BATCH_TILE, _round_up(B, 8))
    B_pad = _round_up(B, TB)
    G = B_pad // TB

    # Zero-copy fold of (H, Cin) onto the lane axis -- no transpose / cast prep
    # pass; the f32 -> bf16 cast happens on the per-tile block inside the kernel.
    x2 = x.reshape(B, NW, H * Cin)
    if B_pad != B:
        x2 = jnp.pad(x2, ((0, B_pad - B), (0, 0), (0, 0)))

    # Conv layers as single-matmul Toeplitz weights (built once, bf16),
    # with conv1/conv2 output columns pre-split into even/odd H positions.
    m1 = _conv_as_matmul(p["cw1"], H)       # (H*Cin,   H1*C1)
    m2 = _conv_as_matmul(p["cw2"], H1p)     # (H1p*C1,  H2*C2)
    m3 = _conv_as_matmul(p["cw3"], H2p)     # (H2p*C2,  H3*C3)
    w1e, w1o, b1e, b1o = _split_even_odd(m1, p["cb1"], H1, C1)
    w2e, w2o, b2e, b2o = _split_even_odd(m2, p["cb2"], H2, C2)
    w3 = m3.astype(jnp.bfloat16)
    b3 = jnp.tile(p["cb3"], (H3,))[None, :]

    lw1, lw2, lw3 = p["lw1"], p["lw2"], p["lw3"]
    lb1, lb2, lb3 = p["lb1"][:, None], p["lb2"][:, None], p["lb3"][:, None]

    weights = (w1e, w1o, b1e, b1o, w2e, w2o, b2e, b2o, w3, b3,
               lw1, lb1, lw2, lb2, lw3, lb3)

    # Advisory cost estimate for XLA's scheduler (review item 8).
    flops = (2 * B_pad * NW * (H * Cin * H1 * C1
                               + H1p * C1 * H2 * C2
                               + H2p * C2 * H3 * C3)
             + 2 * B_pad * (NW * 80 + 80 * 40 + 40))
    bytes_accessed = (x2.size * 4 + B_pad * 4
                      + sum(w.size * w.dtype.itemsize for w in weights))

    out = pl.pallas_call(
        cnn_fog_kernel,
        out_shape=jax.ShapeDtypeStruct((G, 1, TB), jnp.float32),
        grid=(G,),
        in_specs=[pl.BlockSpec((TB, NW, H * Cin), lambda i: (i, 0, 0))]
                 + [_resident(w) for w in weights],
        out_specs=pl.BlockSpec((1, 1, TB), lambda i: (i, 0, 0)),
        compiler_params=pltpu.CompilerParams(
            # Shards the batch grid across the two TensorCores on v7x when
            # G >= 2 (i.e. B > TB); a no-op on single-core v5e/v6e.
            dimension_semantics=("parallel",),
            # ~5 MiB live per step with the lane-folded layout; 32 MiB fits
            # v5e/v6e (128 MiB) and v7x (64 MiB) with plenty of headroom.
            vmem_limit_bytes=32 * 1024 * 1024,
        ),
        cost_estimate=pl.CostEstimate(flops=flops, transcendentals=B_pad,
                                      bytes_accessed=bytes_accessed),
    )(x2, *weights)

    # (G, 1, TB) lane-dense slab -> (B,), matching torch `mlp_out.squeeze()`.
    return out.reshape(-1)[:B]


# ---------------------------------------------------------------------------
# Pure-JAX reference (for correctness check only)
# ---------------------------------------------------------------------------
def ref_forward(x, p):
    xc = jnp.swapaxes(x, -3, -1)                            # NCHW (B, Cin, H, NW)

    def conv(y, w, b):
        o = lax.conv_general_dilated(y, w, (1, 1), "VALID",
                                     dimension_numbers=("NCHW", "OIHW", "NCHW"))
        return o + b[None, :, None, None]

    def maxpool(y):
        return lax.reduce_window(y, -jnp.inf, lax.max,
                                 (1, 1, 2, 1), (1, 1, 2, 1), "VALID")

    y = jax.nn.relu(conv(xc, p["cw1"], p["cb1"]))
    y = maxpool(y)
    y = jax.nn.relu(conv(y, p["cw2"], p["cb2"]))
    y = maxpool(y)
    y = conv(y, p["cw3"], p["cb3"])                         # (B, C3, H3, NW)
    y = jnp.mean(y, axis=2, keepdims=True)                  # AdaptiveAvgPool2d((1,NW))
    y = jnp.swapaxes(y, -3, -1)                             # (B, NW, 1, C3)
    y = jnp.squeeze(y, axis=2)                              # (B, NW, C3)
    g = jnp.mean(y, axis=-1)                                # AvgPool1d(kernel=C3)
    z = jax.nn.relu(g @ p["lw1"].T + p["lb1"])
    z = jax.nn.relu(z @ p["lw2"].T + p["lb2"])
    z = jax.nn.sigmoid(z @ p["lw3"].T + p["lb3"])
    return jnp.squeeze(z)


if __name__ == "__main__":
    B, H, in_channels = 2, 32, 4                 # H path: 32->29->14->11->5->2
    key = jax.random.PRNGKey(0)
    kx, kp = jax.random.split(key)
    x = jax.random.normal(kx, (B, cfg["N_WINDOWS"], H, in_channels), jnp.float32)
    params = init_params(kp, in_channels, cfg["N_MAX_CONV_FILTERS"])

    out = jax.block_until_ready(cnn_fog_forward(x, params))
    ref = jax.block_until_ready(ref_forward(x, params))

    assert out.shape == (B,), out.shape
    # bf16 conv operands (f32 accumulation) vs. f32 reference -> relaxed tol.
    assert jnp.allclose(out, ref, atol=2e-2, rtol=2e-2), (out, ref)
    print("KERNEL_OK")
</pallas_src>

<mosaic_0001>
module attributes {stable_mosaic.version = 11 : i64} {
  func.func @cnn_fog_kernel(%arg0: i32, %arg1: memref<8x8x128xf32, #tpu.memory_space<vmem>>, %arg2: memref<128x240xbf16, #tpu.memory_space<vmem>>, %arg3: memref<128x224xbf16, #tpu.memory_space<vmem>>, %arg4: memref<1x240xf32, #tpu.memory_space<vmem>>, %arg5: memref<1x224xf32, #tpu.memory_space<vmem>>, %arg6: memref<224x48xbf16, #tpu.memory_space<vmem>>, %arg7: memref<224x40xbf16, #tpu.memory_space<vmem>>, %arg8: memref<1x48xf32, #tpu.memory_space<vmem>>, %arg9: memref<1x40xf32, #tpu.memory_space<vmem>>, %arg10: memref<40x8xbf16, #tpu.memory_space<vmem>>, %arg11: memref<1x8xf32, #tpu.memory_space<vmem>>, %arg12: memref<80x8xf32, #tpu.memory_space<vmem>>, %arg13: memref<80x1xf32, #tpu.memory_space<vmem>>, %arg14: memref<40x80xf32, #tpu.memory_space<vmem>>, %arg15: memref<40x1xf32, #tpu.memory_space<vmem>>, %arg16: memref<1x40xf32, #tpu.memory_space<vmem>>, %arg17: memref<1x1xf32, #tpu.memory_space<vmem>>, %arg18: memref<1x1x8xf32, #tpu.memory_space<vmem>>) attributes {dimension_semantics = [#tpu.dimension_semantics<parallel>], iteration_bounds = array<i64: 1>, scalar_prefetch = 0 : i64, scratch_operands = 0 : i64, tpu.core_type = #tpu.core_type<tc>, window_params = [{transform_indices = @transform_0, window_bounds = array<i64: 8, 8, 128>}, {pipeline_mode = #tpu.pipeline_mode<synchronous>, transform_indices = @transform_1, window_bounds = array<i64: 128, 240>}, {pipeline_mode = #tpu.pipeline_mode<synchronous>, transform_indices = @transform_2, window_bounds = array<i64: 128, 224>}, {pipeline_mode = #tpu.pipeline_mode<synchronous>, transform_indices = @transform_3, window_bounds = array<i64: 1, 240>}, {pipeline_mode = #tpu.pipeline_mode<synchronous>, transform_indices = @transform_4, window_bounds = array<i64: 1, 224>}, {pipeline_mode = #tpu.pipeline_mode<synchronous>, transform_indices = @transform_5, window_bounds = array<i64: 224, 48>}, {pipeline_mode = #tpu.pipeline_mode<synchronous>, transform_indices = @transform_6, window_bounds = array<i64: 224, 40>}, {pipeline_mode = #tpu.pipeline_mode<synchronous>, transform_indices = @transform_7, window_bounds = array<i64: 1, 48>}, {pipeline_mode = #tpu.pipeline_mode<synchronous>, transform_indices = @transform_8, window_bounds = array<i64: 1, 40>}, {pipeline_mode = #tpu.pipeline_mode<synchronous>, transform_indices = @transform_9, window_bounds = array<i64: 40, 8>}, {pipeline_mode = #tpu.pipeline_mode<synchronous>, transform_indices = @transform_10, window_bounds = array<i64: 1, 8>}, {pipeline_mode = #tpu.pipeline_mode<synchronous>, transform_indices = @transform_11, window_bounds = array<i64: 80, 8>}, {pipeline_mode = #tpu.pipeline_mode<synchronous>, transform_indices = @transform_12, window_bounds = array<i64: 80, 1>}, {pipeline_mode = #tpu.pipeline_mode<synchronous>, transform_indices = @transform_13, window_bounds = array<i64: 40, 80>}, {pipeline_mode = #tpu.pipeline_mode<synchronous>, transform_indices = @transform_14, window_bounds = array<i64: 40, 1>}, {pipeline_mode = #tpu.pipeline_mode<synchronous>, transform_indices = @transform_15, window_bounds = array<i64: 1, 40>}, {pipeline_mode = #tpu.pipeline_mode<synchronous>, transform_indices = @transform_16, window_bounds = array<i64: 1, 1>}, {transform_indices = @transform_17, window_bounds = array<i64: 1, 1, 8>}]} {
    %c0 = arith.constant 0 : index
    %c0_0 = arith.constant 0 : index
    %c0_1 = arith.constant 0 : index
    %0 = vector.load %arg1[%c0, %c0_0, %c0_1] : memref<8x8x128xf32, #tpu.memory_space<vmem>>, vector<8x8x128xf32>
    %1 = vector.shape_cast %0 : vector<8x8x128xf32> to vector<64x128xf32>
    %2 = arith.truncf %1 : vector<64x128xf32> to vector<64x128xbf16>
    %c0_2 = arith.constant 0 : index
    %c0_3 = arith.constant 0 : index
    %3 = vector.load %arg2[%c0_2, %c0_3] : memref<128x240xbf16, #tpu.memory_space<vmem>>, vector<128x240xbf16>
    %cst = arith.constant dense<0.000000e+00> : vector<64x240xf32>
    %4 = tpu.matmul %2, %3, %cst {dimension_numbers = #tpu.dot_dimension_numbers<[1], [0], [0], [1], [0, 0, 1, 1], [], []>} : vector<64x128xbf16>, vector<128x240xbf16>, vector<64x240xf32> -> vector<64x240xf32>
    %c0_4 = arith.constant 0 : index
    %c0_5 = arith.constant 0 : index
    %5 = vector.load %arg4[%c0_4, %c0_5] : memref<1x240xf32, #tpu.memory_space<vmem>>, vector<1x240xf32>
    %6 = vector.broadcast %5 : vector<1x240xf32> to vector<64x240xf32>
    %7 = arith.addf %4, %6 : vector<64x240xf32>
    %cst_6 = arith.constant 0.000000e+00 : f32
    %8 = vector.broadcast %cst_6 : f32 to vector<64x240xf32>
    %9 = arith.maximumf %7, %8 : vector<64x240xf32>
    %c0_7 = arith.constant 0 : index
    %c0_8 = arith.constant 0 : index
    %10 = vector.load %arg3[%c0_7, %c0_8] : memref<128x224xbf16, #tpu.memory_space<vmem>>, vector<128x224xbf16>
    %cst_9 = arith.constant dense<0.000000e+00> : vector<64x224xf32>
    %11 = tpu.matmul %2, %10, %cst_9 {dimension_numbers = #tpu.dot_dimension_numbers<[1], [0], [0], [1], [0, 0, 1, 1], [], []>} : vector<64x128xbf16>, vector<128x224xbf16>, vector<64x224xf32> -> vector<64x224xf32>
    %c0_10 = arith.constant 0 : index
    %c0_11 = arith.constant 0 : index
    %12 = vector.load %arg5[%c0_10, %c0_11] : memref<1x224xf32, #tpu.memory_space<vmem>>, vector<1x224xf32>
    %13 = vector.broadcast %12 : vector<1x224xf32> to vector<64x224xf32>
    %14 = arith.addf %11, %13 : vector<64x224xf32>
    %cst_12 = arith.constant 0.000000e+00 : f32
    %15 = vector.broadcast %cst_12 : f32 to vector<64x224xf32>
    %16 = arith.maximumf %14, %15 : vector<64x224xf32>
    %17 = vector.extract_strided_slice %9 {offsets = [0, 0], sizes = [64, 224], strides = [1, 1]} : vector<64x240xf32> to vector<64x224xf32>
    %18 = arith.maximumf %17, %16 : vector<64x224xf32>
    %19 = arith.truncf %18 : vector<64x224xf32> to vector<64x224xbf16>
    %c0_13 = arith.constant 0 : index
    %c0_14 = arith.constant 0 : index
    %20 = vector.load %arg6[%c0_13, %c0_14] : memref<224x48xbf16, #tpu.memory_space<vmem>>, vector<224x48xbf16>
    %cst_15 = arith.constant dense<0.000000e+00> : vector<64x48xf32>
    %21 = tpu.matmul %19, %20, %cst_15 {dimension_numbers = #tpu.dot_dimension_numbers<[1], [0], [0], [1], [0, 0, 1, 1], [], []>} : vector<64x224xbf16>, vector<224x48xbf16>, vector<64x48xf32> -> vector<64x48xf32>
    %c0_16 = arith.constant 0 : index
    %c0_17 = arith.constant 0 : index
    %22 = vector.load %arg8[%c0_16, %c0_17] : memref<1x48xf32, #tpu.memory_space<vmem>>, vector<1x48xf32>
    %23 = vector.broadcast %22 : vector<1x48xf32> to vector<64x48xf32>
    %24 = arith.addf %21, %23 : vector<64x48xf32>
    %cst_18 = arith.constant 0.000000e+00 : f32
    %25 = vector.broadcast %cst_18 : f32 to vector<64x48xf32>
    %26 = arith.maximumf %24, %25 : vector<64x48xf32>
    %c0_19 = arith.constant 0 : index
    %c0_20 = arith.constant 0 : index
    %27 = vector.load %arg7[%c0_19, %c0_20] : memref<224x40xbf16, #tpu.memory_space<vmem>>, vector<224x40xbf16>
    %cst_21 = arith.constant dense<0.000000e+00> : vector<64x40xf32>
    %28 = tpu.matmul %19, %27, %cst_21 {dimension_numbers = #tpu.dot_dimension_numbers<[1], [0], [0], [1], [0, 0, 1, 1], [], []>} : vector<64x224xbf16>, vector<224x40xbf16>, vector<64x40xf32> -> vector<64x40xf32>
    %c0_22 = arith.constant 0 : index
    %c0_23 = arith.constant 0 : index
    %29 = vector.load %arg9[%c0_22, %c0_23] : memref<1x40xf32, #tpu.memory_space<vmem>>, vector<1x40xf32>
    %30 = vector.broadcast %29 : vector<1x40xf32> to vector<64x40xf32>
    %31 = arith.addf %28, %30 : vector<64x40xf32>
    %cst_24 = arith.constant 0.000000e+00 : f32
    %32 = vector.broadcast %cst_24 : f32 to vector<64x40xf32>
    %33 = arith.maximumf %31, %32 : vector<64x40xf32>
    %34 = vector.extract_strided_slice %26 {offsets = [0, 0], sizes = [64, 40], strides = [1, 1]} : vector<64x48xf32> to vector<64x40xf32>
    %35 = arith.maximumf %34, %33 : vector<64x40xf32>
    %36 = arith.truncf %35 : vector<64x40xf32> to vector<64x40xbf16>
    %c0_25 = arith.constant 0 : index
    %c0_26 = arith.constant 0 : index
    %37 = vector.load %arg10[%c0_25, %c0_26] : memref<40x8xbf16, #tpu.memory_space<vmem>>, vector<40x8xbf16>
    %cst_27 = arith.constant dense<0.000000e+00> : vector<64x8xf32>
    %38 = tpu.matmul %36, %37, %cst_27 {dimension_numbers = #tpu.dot_dimension_numbers<[1], [0], [0], [1], [0, 0, 1, 1], [], []>} : vector<64x40xbf16>, vector<40x8xbf16>, vector<64x8xf32> -> vector<64x8xf32>
    %c0_28 = arith.constant 0 : index
    %c0_29 = arith.constant 0 : index
    %39 = vector.load %arg11[%c0_28, %c0_29] : memref<1x8xf32, #tpu.memory_space<vmem>>, vector<1x8xf32>
    %40 = vector.broadcast %39 : vector<1x8xf32> to vector<64x8xf32>
    %41 = arith.addf %38, %40 : vector<64x8xf32>
    %42 = vector.shape_cast %41 : vector<64x8xf32> to vector<8x8x8xf32>
    %cst_30 = arith.constant dense<0.000000e+00> : vector<8x8xf32>
    %43 = vector.multi_reduction <add>, %42, %cst_30 [2] : vector<8x8x8xf32> to vector<8x8xf32>
    %cst_31 = arith.constant 1.250000e-01 : f32
    %44 = vector.broadcast %cst_31 : f32 to vector<8x8xf32>
    %45 = arith.mulf %43, %44 : vector<8x8xf32>
    %c0_32 = arith.constant 0 : index
    %c0_33 = arith.constant 0 : index
    %46 = vector.load %arg12[%c0_32, %c0_33] : memref<80x8xf32, #tpu.memory_space<vmem>>, vector<80x8xf32>
    %47 = tpu.transpose %45, [1, 0] : vector<8x8xf32> -> vector<8x8xf32>
    %cst_34 = arith.constant dense<0.000000e+00> : vector<80x8xf32>
    %48 = tpu.matmul %46, %47, %cst_34 {dimension_numbers = #tpu.dot_dimension_numbers<[1], [0], [0], [1], [0, 0, 1, 1], [], []>} : vector<80x8xf32>, vector<8x8xf32>, vector<80x8xf32> -> vector<80x8xf32>
    %c0_35 = arith.constant 0 : index
    %c0_36 = arith.constant 0 : index
    %49 = vector.load %arg13[%c0_35, %c0_36] : memref<80x1xf32, #tpu.memory_space<vmem>>, vector<80x1xf32>
    %50 = vector.broadcast %49 : vector<80x1xf32> to vector<80x8xf32>
    %51 = arith.addf %48, %50 : vector<80x8xf32>
    %cst_37 = arith.constant 0.000000e+00 : f32
    %52 = vector.broadcast %cst_37 : f32 to vector<80x8xf32>
    %53 = arith.maximumf %51, %52 : vector<80x8xf32>
    %c0_38 = arith.constant 0 : index
    %c0_39 = arith.constant 0 : index
    %54 = vector.load %arg14[%c0_38, %c0_39] : memref<40x80xf32, #tpu.memory_space<vmem>>, vector<40x80xf32>
    %cst_40 = arith.constant dense<0.000000e+00> : vector<40x8xf32>
    %55 = tpu.matmul %54, %53, %cst_40 {dimension_numbers = #tpu.dot_dimension_numbers<[1], [0], [0], [1], [0, 0, 1, 1], [], []>} : vector<40x80xf32>, vector<80x8xf32>, vector<40x8xf32> -> vector<40x8xf32>
    %c0_41 = arith.constant 0 : index
    %c0_42 = arith.constant 0 : index
    %56 = vector.load %arg15[%c0_41, %c0_42] : memref<40x1xf32, #tpu.memory_space<vmem>>, vector<40x1xf32>
    %57 = vector.broadcast %56 : vector<40x1xf32> to vector<40x8xf32>
    %58 = arith.addf %55, %57 : vector<40x8xf32>
    %cst_43 = arith.constant 0.000000e+00 : f32
    %59 = vector.broadcast %cst_43 : f32 to vector<40x8xf32>
    %60 = arith.maximumf %58, %59 : vector<40x8xf32>
    %c0_44 = arith.constant 0 : index
    %c0_45 = arith.constant 0 : index
    %61 = vector.load %arg16[%c0_44, %c0_45] : memref<1x40xf32, #tpu.memory_space<vmem>>, vector<1x40xf32>
    %cst_46 = arith.constant dense<0.000000e+00> : vector<1x8xf32>
    %62 = tpu.matmul %61, %60, %cst_46 {dimension_numbers = #tpu.dot_dimension_numbers<[1], [0], [0], [1], [0, 0, 1, 1], [], []>} : vector<1x40xf32>, vector<40x8xf32>, vector<1x8xf32> -> vector<1x8xf32>
    %c0_47 = arith.constant 0 : index
    %c0_48 = arith.constant 0 : index
    %63 = vector.load %arg17[%c0_47, %c0_48] : memref<1x1xf32, #tpu.memory_space<vmem>>, vector<1x1xf32>
    %64 = vector.broadcast %63 : vector<1x1xf32> to vector<1x8xf32>
    %65 = arith.addf %62, %64 : vector<1x8xf32>
    %66 = arith.negf %65 : vector<1x8xf32>
    %67 = math.exp %66 : vector<1x8xf32>
    %cst_49 = arith.constant 1.000000e+00 : f32
    %68 = vector.broadcast %cst_49 : f32 to vector<1x8xf32>
    %69 = arith.addf %68, %67 : vector<1x8xf32>
    %70 = arith.divf %68, %69 : vector<1x8xf32>
    %71 = vector.shape_cast %70 : vector<1x8xf32> to vector<1x1x8xf32>
    %c0_50 = arith.constant 0 : index
    %c0_51 = arith.constant 0 : index
    %c0_52 = arith.constant 0 : index
    %72 = vector.load %arg18[%c0_50, %c0_51, %c0_52] : memref<1x1x8xf32, #tpu.memory_space<vmem>>, vector<1x1x8xf32>
    tpu.vector_store %arg18[%c0_50, %c0_51, %c0_52], %71 {strides = array<i32>} : memref<1x1x8xf32, #tpu.memory_space<vmem>>, vector<1x1x8xf32>,
    return
  }
  func.func @transform_0(%arg0: i32) -> (i32, i32, i32) {
    %c0_i32 = arith.constant 0 : i32
    %c0_i32_0 = arith.constant 0 : i32
    %c0_i32_1 = arith.constant 0 : i32
    return %arg0, %c0_i32, %c0_i32_0 : i32, i32, i32
  }
  func.func @transform_1(%arg0: i32) -> (i32, i32) {
    %c0_i32 = arith.constant 0 : i32
    %c0_i32_0 = arith.constant 0 : i32
    %c0_i32_1 = arith.constant 0 : i32
    return %c0_i32, %c0_i32_0 : i32, i32
  }
  func.func @transform_2(%arg0: i32) -> (i32, i32) {
    %c0_i32 = arith.constant 0 : i32
    %c0_i32_0 = arith.constant 0 : i32
    %c0_i32_1 = arith.constant 0 : i32
    return %c0_i32, %c0_i32_0 : i32, i32
  }
  func.func @transform_3(%arg0: i32) -> (i32, i32) {
    %c0_i32 = arith.constant 0 : i32
    %c0_i32_0 = arith.constant 0 : i32
    %c0_i32_1 = arith.constant 0 : i32
    return %c0_i32, %c0_i32_0 : i32, i32
  }
  func.func @transform_4(%arg0: i32) -> (i32, i32) {
    %c0_i32 = arith.constant 0 : i32
    %c0_i32_0 = arith.constant 0 : i32
    %c0_i32_1 = arith.constant 0 : i32
    return %c0_i32, %c0_i32_0 : i32, i32
  }
  func.func @transform_5(%arg0: i32) -> (i32, i32) {
    %c0_i32 = arith.constant 0 : i32
    %c0_i32_0 = arith.constant 0 : i32
    %c0_i32_1 = arith.constant 0 : i32
    return %c0_i32, %c0_i32_0 : i32, i32
  }
  func.func @transform_6(%arg0: i32) -> (i32, i32) {
    %c0_i32 = arith.constant 0 : i32
    %c0_i32_0 = arith.constant 0 : i32
    %c0_i32_1 = arith.constant 0 : i32
    return %c0_i32, %c0_i32_0 : i32, i32
  }
  func.func @transform_7(%arg0: i32) -> (i32, i32) {
    %c0_i32 = arith.constant 0 : i32
    %c0_i32_0 = arith.constant 0 : i32
    %c0_i32_1 = arith.constant 0 : i32
    return %c0_i32, %c0_i32_0 : i32, i32
  }
  func.func @transform_8(%arg0: i32) -> (i32, i32) {
    %c0_i32 = arith.constant 0 : i32
    %c0_i32_0 = arith.constant 0 : i32
    %c0_i32_1 = arith.constant 0 : i32
    return %c0_i32, %c0_i32_0 : i32, i32
  }
  func.func @transform_9(%arg0: i32) -> (i32, i32) {
    %c0_i32 = arith.constant 0 : i32
    %c0_i32_0 = arith.constant 0 : i32
    %c0_i32_1 = arith.constant 0 : i32
    return %c0_i32, %c0_i32_0 : i32, i32
  }
  func.func @transform_10(%arg0: i32) -> (i32, i32) {
    %c0_i32 = arith.constant 0 : i32
    %c0_i32_0 = arith.constant 0 : i32
    %c0_i32_1 = arith.constant 0 : i32
    return %c0_i32, %c0_i32_0 : i32, i32
  }
  func.func @transform_11(%arg0: i32) -> (i32, i32) {
    %c0_i32 = arith.constant 0 : i32
    %c0_i32_0 = arith.constant 0 : i32
    %c0_i32_1 = arith.constant 0 : i32
    return %c0_i32, %c0_i32_0 : i32, i32
  }
  func.func @transform_12(%arg0: i32) -> (i32, i32) {
    %c0_i32 = arith.constant 0 : i32
    %c0_i32_0 = arith.constant 0 : i32
    %c0_i32_1 = arith.constant 0 : i32
    return %c0_i32, %c0_i32_0 : i32, i32
  }
  func.func @transform_13(%arg0: i32) -> (i32, i32) {
    %c0_i32 = arith.constant 0 : i32
    %c0_i32_0 = arith.constant 0 : i32
    %c0_i32_1 = arith.constant 0 : i32
    return %c0_i32, %c0_i32_0 : i32, i32
  }
  func.func @transform_14(%arg0: i32) -> (i32, i32) {
    %c0_i32 = arith.constant 0 : i32
    %c0_i32_0 = arith.constant 0 : i32
    %c0_i32_1 = arith.constant 0 : i32
    return %c0_i32, %c0_i32_0 : i32, i32
  }
  func.func @transform_15(%arg0: i32) -> (i32, i32) {
    %c0_i32 = arith.constant 0 : i32
    %c0_i32_0 = arith.constant 0 : i32
    %c0_i32_1 = arith.constant 0 : i32
    return %c0_i32, %c0_i32_0 : i32, i32
  }
  func.func @transform_16(%arg0: i32) -> (i32, i32) {
    %c0_i32 = arith.constant 0 : i32
    %c0_i32_0 = arith.constant 0 : i32
    %c0_i32_1 = arith.constant 0 : i32
    return %c0_i32, %c0_i32_0 : i32, i32
  }
  func.func @transform_17(%arg0: i32) -> (i32, i32, i32) {
    %c0_i32 = arith.constant 0 : i32
    %c0_i32_0 = arith.constant 0 : i32
    %c0_i32_1 = arith.constant 0 : i32
    return %arg0, %c0_i32, %c0_i32_0 : i32, i32, i32
  }
}

</mosaic_0001>

<llo_original>
// kernel: tile.28
$region0: #{tile.28}
  #allocation0 [shape = 's32[1]{0}', space=sflag, size = 0x4, scoped, tag = 'scoped memory for tile.28']
  %s0 = inlined_call_operand.vmem [shape: f32[16], index: 0, kind: input, shape index: {}]
  %s1 = inlined_call_operand.vmem [shape: f32[15,16], index: 1, kind: output, shape index: {}]
  // Predicated region
  $region2: #{tile.28} parent=0 // pred_check
    _
  $region3: #{tile.28} parent=0 // pred_check_branch
    %3 = sbr.rel (0) target = $region5
  $region4: #{tile.28} parent=0 // pred_region
    _
  $region5: #{tile.28} parent=0 // pred_fallthru
    _
  %v4 = vld [vmem:[%s0] ss:$0 sm:$0xff]
  %5 = vst [vmem:[%s1] sm:$0xff] %v4
  %s6 = scalar_lea.vmem %s1, 8
  %7 = vst [vmem:[%s6] sm:$0xff] %v4

// kernel: tile.29
$region0: #{tile.29}
  %s0 = inlined_call_operand.vmem [shape: f32[15,16], index: 0, kind: input, shape index: {}]
  %s1 = inlined_call_operand.vmem [shape: f32[1,240], index: 1, kind: output, shape index: {}]
  $region1: #{tile.29} parent=0
    #allocation0 [shape = 'u8[8192]{0}', space=vmem, size = 0x2000, scoped, tag = 'scoped mem for output reshape']
    %s2 = smov 3
    %v3 = vld [vmem:[%s0] ss:$8 sm:%s2]
    %vm4 = vcmask 130048
    %5 = vst.msk [vmem:[#allocation0] ss:$8 sm:$0x3] %vm4, %v3
    %s6 = scalar_lea.vmem %s0, 7
    %v7 = vld [vmem:[%s6] sm:$0x1]
    %8 = vrot.lane.b32.xlu0 %v7, 112
    %v9 = vpop.permute.xlu0 %8
    %vm10 = vcmask 1048448
    %11 = vst.msk [vmem:[#allocation0] sm:$0x1] %vm10, %v9
    %s12 = scalar_lea.vmem %s0, 6
    %s13 = smov 3
    %v14 = vld [vmem:[%s12] ss:$8 sm:%s13]
    %15 = vrot.lane.b32.xlu0 %v14, 96
    %v16 = vpop.permute.xlu0 %15
    %vm17 = vcmask 917248
    %18 = vst.msk [vmem:[#allocation0] ss:$8 sm:$0x3] %vm17, %v16
    %s19 = scalar_lea.vmem %s0, 5
    %s20 = smov 3
    %v21 = vld [vmem:[%s19] ss:$8 sm:%s20]
    %22 = vrot.lane.b32.xlu0 %v21, 80
    %v23 = vpop.permute.xlu0 %22
    %vm24 = vcmask 786048
    %25 = vst.msk [vmem:[#allocation0] ss:$8 sm:$0x3] %vm24, %v23
    %s26 = scalar_lea.vmem %s0, 4
    %s27 = smov 3
    %v28 = vld [vmem:[%s26] ss:$8 sm:%s27]
    %29 = vrot.lane.b32.xlu0 %v28, 64
    %v30 = vpop.permute.xlu0 %29
    %vm31 = vcmask 654848
    %32 = vst.msk [vmem:[#allocation0] ss:$8 sm:$0x3] %vm31, %v30
    %s33 = scalar_lea.vmem %s0, 3
    %s34 = smov 3
    %v35 = vld [vmem:[%s33] ss:$8 sm:%s34]
    %36 = vrot.lane.b32.xlu0 %v35, 48
    %v37 = vpop.permute.xlu0 %36
    %vm38 = vcmask 523648
    %39 = vst.msk [vmem:[#allocation0] ss:$8 sm:$0x3] %vm38, %v37
    %s40 = scalar_lea.vmem %s0, 2
    %s41 = smov 3
    %v42 = vld [vmem:[%s40] ss:$8 sm:%s41]
    %43 = vrot.lane.b32.xlu0 %v42, 32
    %v44 = vpop.permute.xlu0 %43
    %vm45 = vcmask 392448
    %46 = vst.msk [vmem:[#allocation0] ss:$8 sm:$0x3] %vm45, %v44
    %s47 = scalar_lea.vmem %s0, 1
    %s48 = smov 3
    %v49 = vld [vmem:[%s47] ss:$8 sm:%s48]
    %50 = vrot.lane.b32.xlu0 %v49, 16
    %v51 = vpop.permute.xlu0 %50
    %vm52 = vcmask 261248
    %53 = vst.msk [vmem:[#allocation0] ss:$8 sm:$0x3] %vm52, %v51
    %s55 = ssub.s32 2, 1
    %v56 = vld [vmem:[#allocation0] sm:%s55]
    %s58 = ssub.s32 2, 1
    %59 = vst [vmem:[%s1] sm:%s58] %v56
    %s60 = scalar_lea.vmem [#allocation0], 8
    %v61 = vld [vmem:[%s60] sm:%s55]
    %s63 = ssub.s32 2, 1
    %s64 = scalar_lea.vmem %s1, 1
    %65 = vst [vmem:[%s64] sm:%s63] %v61

// kernel: tile.33
$region0: #{tile.33}
  #allocation0 [shape = 's32[1]{0}', space=sflag, size = 0x4, scoped, tag = 'scoped memory for tile.33']
  %s0 = inlined_call_operand.vmem [shape: f32[16], index: 0, kind: input, shape index: {}]
  %s1 = inlined_call_operand.vmem [shape: f32[14,16], index: 1, kind: output, shape index: {}]
  // Predicated region
  $region2: #{tile.33} parent=0 // pred_check
    _
  $region3: #{tile.33} parent=0 // pred_check_branch
    %3 = sbr.rel (0) target = $region5
  $region4: #{tile.33} parent=0 // pred_region
    _
  $region5: #{tile.33} parent=0 // pred_fallthru
    _
  %v4 = vld [vmem:[%s0] ss:$0 sm:$0xff]
  %5 = vst [vmem:[%s1] sm:$0xff] %v4
  %s6 = scalar_lea.vmem %s1, 8
  %7 = vst [vmem:[%s6] sm:$0xff] %v4

// kernel: tile.34
$region0: #{tile.34}
  %s0 = inlined_call_operand.vmem [shape: f32[14,16], index: 0, kind: input, shape index: {}]
  %s1 = inlined_call_operand.vmem [shape: f32[1,224], index: 1, kind: output, shape index: {}]
  $region1: #{tile.34} parent=0
    #allocation0 [shape = 'u8[8192]{0}', space=vmem, size = 0x2000, scoped, tag = 'scoped mem for output reshape']
    %s2 = smov 3
    %v3 = vld [vmem:[%s0] ss:$8 sm:%s2]
    %vm4 = vcmask 130048
    %5 = vst.msk [vmem:[#allocation0] ss:$8 sm:$0x3] %vm4, %v3
    %s6 = scalar_lea.vmem %s0, 7
    %v7 = vld [vmem:[%s6] sm:$0x1]
    %8 = vrot.lane.b32.xlu0 %v7, 112
    %v9 = vpop.permute.xlu0 %8
    %vm10 = vcmask 1048448
    %11 = vst.msk [vmem:[#allocation0] sm:$0x1] %vm10, %v9
    %s12 = scalar_lea.vmem %s0, 6
    %v13 = vld [vmem:[%s12] sm:$0x1]
    %14 = vrot.lane.b32.xlu0 %v13, 96
    %v15 = vpop.permute.xlu0 %14
    %vm16 = vcmask 917248
    %17 = vst.msk [vmem:[#allocation0] sm:$0x1] %vm16, %v15
    %s18 = scalar_lea.vmem %s0, 5
    %s19 = smov 3
    %v20 = vld [vmem:[%s18] ss:$8 sm:%s19]
    %21 = vrot.lane.b32.xlu0 %v20, 80
    %v22 = vpop.permute.xlu0 %21
    %vm23 = vcmask 786048
    %24 = vst.msk [vmem:[#allocation0] ss:$8 sm:$0x3] %vm23, %v22
    %s25 = scalar_lea.vmem %s0, 4
    %s26 = smov 3
    %v27 = vld [vmem:[%s25] ss:$8 sm:%s26]
    %28 = vrot.lane.b32.xlu0 %v27, 64
    %v29 = vpop.permute.xlu0 %28
    %vm30 = vcmask 654848
    %31 = vst.msk [vmem:[#allocation0] ss:$8 sm:$0x3] %vm30, %v29
    %s32 = scalar_lea.vmem %s0, 3
    %s33 = smov 3
    %v34 = vld [vmem:[%s32] ss:$8 sm:%s33]
    %35 = vrot.lane.b32.xlu0 %v34, 48
    %v36 = vpop.permute.xlu0 %35
    %vm37 = vcmask 523648
    %38 = vst.msk [vmem:[#allocation0] ss:$8 sm:$0x3] %vm37, %v36
    %s39 = scalar_lea.vmem %s0, 2
    %s40 = smov 3
    %v41 = vld [vmem:[%s39] ss:$8 sm:%s40]
    %42 = vrot.lane.b32.xlu0 %v41, 32
    %v43 = vpop.permute.xlu0 %42
    %vm44 = vcmask 392448
    %45 = vst.msk [vmem:[#allocation0] ss:$8 sm:$0x3] %vm44, %v43
    %s46 = scalar_lea.vmem %s0, 1
    %s47 = smov 3
    %v48 = vld [vmem:[%s46] ss:$8 sm:%s47]
    %49 = vrot.lane.b32.xlu0 %v48, 16
    %v50 = vpop.permute.xlu0 %49
    %vm51 = vcmask 261248
    %52 = vst.msk [vmem:[#allocation0] ss:$8 sm:$0x3] %vm51, %v50
    %s54 = ssub.s32 2, 1
    %v55 = vld [vmem:[#allocation0] sm:%s54]
    %s57 = ssub.s32 2, 1
    %58 = vst [vmem:[%s1] sm:%s57] %v55
    %s59 = scalar_lea.vmem [#allocation0], 8
    %v60 = vld [vmem:[%s59] sm:%s54]
    %s62 = ssub.s32 2, 1
    %s63 = scalar_lea.vmem %s1, 1
    %64 = vst [vmem:[%s63] sm:%s62] %v60

// kernel: tile.38
$region0: #{tile.38}
  #allocation0 [shape = 's32[1]{0}', space=sflag, size = 0x4, scoped, tag = 'scoped memory for tile.38']
  %s0 = inlined_call_operand.vmem [shape: f32[8], index: 0, kind: input, shape index: {}]
  %s1 = inlined_call_operand.vmem [shape: f32[6,8], index: 1, kind: output, shape index: {}]
  // Predicated region
  $region2: #{tile.38} parent=0 // pred_check
    _
  $region3: #{tile.38} parent=0 // pred_check_branch
    %3 = sbr.rel (0) target = $region5
  $region4: #{tile.38} parent=0 // pred_region
    _
  $region5: #{tile.38} parent=0 // pred_fallthru
    _
  %v4 = vld [vmem:[%s0] ss:$0 sm:$0xff]
  %5 = vst [vmem:[%s1] sm:$0xff] %v4

// kernel: tile.39
$region0: #{tile.39}
  %s0 = inlined_call_operand.vmem [shape: f32[6,8], index: 0, kind: input, shape index: {}]
  %s1 = inlined_call_operand.vmem [shape: f32[1,48], index: 1, kind: output, shape index: {}]
  $region1: #{tile.39} parent=0
    #allocation0 [shape = 'u8[4096]{0}', space=vmem, size = 0x1000, scoped, tag = 'scoped mem for output reshape']
    %v2 = vld [vmem:[%s0] sm:$0x1]
    %vm3 = vcmask 64512
    %4 = vst.msk [vmem:[#allocation0] sm:$0x1] %vm3, %v2
    %s5 = scalar_lea.vmem %s0, 5
    %v6 = vld [vmem:[%s5] sm:$0x1]
    %7 = vrot.lane.b32.xlu0 %v6, 40
    %v8 = vpop.permute.xlu0 %7
    %vm9 = vcmask 392512
    %10 = vst.msk [vmem:[#allocation0] sm:$0x1] %vm9, %v8
    %s11 = scalar_lea.vmem %s0, 4
    %v12 = vld [vmem:[%s11] sm:$0x1]
    %13 = vrot.lane.b32.xlu0 %v12, 32
    %v14 = vpop.permute.xlu0 %13
    %vm15 = vcmask 326912
    %16 = vst.msk [vmem:[#allocation0] sm:$0x1] %vm15, %v14
    %s17 = scalar_lea.vmem %s0, 3
    %v18 = vld [vmem:[%s17] sm:$0x1]
    %19 = vrot.lane.b32.xlu0 %v18, 24
    %v20 = vpop.permute.xlu0 %19
    %vm21 = vcmask 261312
    %22 = vst.msk [vmem:[#allocation0] sm:$0x1] %vm21, %v20
    %s23 = scalar_lea.vmem %s0, 2
    %v24 = vld [vmem:[%s23] sm:$0x1]
    %25 = vrot.lane.b32.xlu0 %v24, 16
    %v26 = vpop.permute.xlu0 %25
    %vm27 = vcmask 195712
    %28 = vst.msk [vmem:[#allocation0] sm:$0x1] %vm27, %v26
    %s29 = scalar_lea.vmem %s0, 1
    %v30 = vld [vmem:[%s29] sm:$0x1]
    %31 = vrot.lane.b32.xlu0 %v30, 8
    %v32 = vpop.permute.xlu0 %31
    %vm33 = vcmask 130112
    %34 = vst.msk [vmem:[#allocation0] sm:$0x1] %vm33, %v32
    %s36 = ssub.s32 2, 1
    %v37 = vld [vmem:[#allocation0] sm:%s36]
    %s39 = ssub.s32 2, 1
    %40 = vst [vmem:[%s1] sm:%s39] %v37

// kernel: tile.43
$region0: #{tile.43}
  #allocation0 [shape = 's32[1]{0}', space=sflag, size = 0x4, scoped, tag = 'scoped memory for tile.43']
  %s0 = inlined_call_operand.vmem [shape: f32[8], index: 0, kind: input, shape index: {}]
  %s1 = inlined_call_operand.vmem [shape: f32[5,8], index: 1, kind: output, shape index: {}]
  // Predicated region
  $region2: #{tile.43} parent=0 // pred_check
    _
  $region3: #{tile.43} parent=0 // pred_check_branch
    %3 = sbr.rel (0) target = $region5
  $region4: #{tile.43} parent=0 // pred_region
    _
  $region5: #{tile.43} parent=0 // pred_fallthru
    _
  %v4 = vld [vmem:[%s0] ss:$0 sm:$0xff]
  %5 = vst [vmem:[%s1] sm:$0xff] %v4

// kernel: tile.44
$region0: #{tile.44}
  %s0 = inlined_call_operand.vmem [shape: f32[5,8], index: 0, kind: input, shape index: {}]
  %s1 = inlined_call_operand.vmem [shape: f32[1,40], index: 1, kind: output, shape index: {}]
  $region1: #{tile.44} parent=0
    #allocation0 [shape = 'u8[4096]{0}', space=vmem, size = 0x1000, scoped, tag = 'scoped mem for output reshape']
    %v2 = vld [vmem:[%s0] sm:$0x1]
    %vm3 = vcmask 64512
    %4 = vst.msk [vmem:[#allocation0] sm:$0x1] %vm3, %v2
    %s5 = scalar_lea.vmem %s0, 4
    %v6 = vld [vmem:[%s5] sm:$0x1]
    %7 = vrot.lane.b32.xlu0 %v6, 32
    %v8 = vpop.permute.xlu0 %7
    %vm9 = vcmask 326912
    %10 = vst.msk [vmem:[#allocation0] sm:$0x1] %vm9, %v8
    %s11 = scalar_lea.vmem %s0, 3
    %v12 = vld [vmem:[%s11] sm:$0x1]
    %13 = vrot.lane.b32.xlu0 %v12, 24
    %v14 = vpop.permute.xlu0 %13
    %vm15 = vcmask 261312
    %16 = vst.msk [vmem:[#allocation0] sm:$0x1] %vm15, %v14
    %s17 = scalar_lea.vmem %s0, 2
    %v18 = vld [vmem:[%s17] sm:$0x1]
    %19 = vrot.lane.b32.xlu0 %v18, 16
    %v20 = vpop.permute.xlu0 %19
    %vm21 = vcmask 195712
    %22 = vst.msk [vmem:[#allocation0] sm:$0x1] %vm21, %v20
    %s23 = scalar_lea.vmem %s0, 1
    %v24 = vld [vmem:[%s23] sm:$0x1]
    %25 = vrot.lane.b32.xlu0 %v24, 8
    %v26 = vpop.permute.xlu0 %25
    %vm27 = vcmask 130112
    %28 = vst.msk [vmem:[#allocation0] sm:$0x1] %vm27, %v26
    %s30 = ssub.s32 2, 1
    %v31 = vld [vmem:[#allocation0] sm:%s30]
    %s33 = ssub.s32 2, 1
    %34 = vst [vmem:[%s1] sm:%s33] %v31

// kernel: tile.48
$region0: #{tile.48}
  #allocation0 [shape = 's32[1]{0}', space=sflag, size = 0x4, scoped, tag = 'scoped memory for tile.48']
  %s0 = inlined_call_operand.vmem [shape: f32[4], index: 0, kind: input, shape index: {}]
  %s1 = inlined_call_operand.vmem [shape: f32[2,4], index: 1, kind: output, shape index: {}]
  // Predicated region
  $region2: #{tile.48} parent=0 // pred_check
    _
  $region3: #{tile.48} parent=0 // pred_check_branch
    %3 = sbr.rel (0) target = $region5
  $region4: #{tile.48} parent=0 // pred_region
    _
  $region5: #{tile.48} parent=0 // pred_fallthru
    _
  %v4 = vld [vmem:[%s0] ss:$0 sm:$0xff]
  %5 = vst [vmem:[%s1] sm:$0x3] %v4

// kernel: tile.49
$region0: #{tile.49}
  %s0 = inlined_call_operand.vmem [shape: f32[2,4], index: 0, kind: input, shape index: {}]
  %s1 = inlined_call_operand.vmem [shape: f32[1,8], index: 1, kind: output, shape index: {}]
  $region1: #{tile.49} parent=0
    #allocation0 [shape = 'u8[4096]{0}', space=vmem, size = 0x1000, scoped, tag = 'scoped mem for output reshape']
    #allocation1 [shape = 'u8[4096]{0}', space=vmem, size = 0x1000, scoped, tag = 'scoped mem for input reshape']
    %s3 = ssub.s32 4, 1
    %v4 = vld [vmem:[%s0] sm:%s3]
    %5 = vst [vmem:[#allocation1] sm:%s3] %v4
    %v6 = vld [vmem:[#allocation1] sm:$0x1]
    %vm7 = vcmask 31744
    %8 = vst.msk [vmem:[#allocation0] sm:$0x1] %vm7, %v6
    %s9 = scalar_lea.vmem [#allocation1], 1
    %v10 = vld [vmem:[%s9] sm:$0x1]
    %11 = vrot.lane.b32.xlu0 %v10, 4
    %v12 = vpop.permute.xlu0 %11
    %vm13 = vcmask 64544
    %14 = vst.msk [vmem:[#allocation0] sm:$0x1] %vm13, %v12
    %s16 = ssub.s32 2, 1
    %v17 = vld [vmem:[#allocation0] sm:%s16]
    %s19 = ssub.s32 2, 1
    %20 = vst [vmem:[%s1] sm:%s19] %v17

// kernel: cnn_fog_forward.1
$region0: #{cnn_fog_forward.1}
  #allocation0 [shape = 'u32[]', space=smem, size = 0x4, offset = 0x4, fixed_abs, tag = 'smem constant byte address 0x4 - core index']
  #allocation1 [shape = 'u32[72,128]{1,0:T(1,128)}', space=vmem, size = 0x9000, scoped, tag = 'internal scratch']
  #allocation2 [shape = 'f32[1,1]{1,0:T(1,128)S(1)}', space=vmem, size = 0x200, scoped, tag = 'scoped memory for cnn_fog_forward.1']
  %s0 = inlined_call_operand.vmem [shape: f32[8,8,128], index: 0, kind: input, shape index: {}]
  %s1 = inlined_call_operand.vmem [shape: bf16[128,240], index: 1, kind: input, shape index: {}]
  %s2 = inlined_call_operand.vmem [shape: bf16[128,224], index: 2, kind: input, shape index: {}]
  %s3 = inlined_call_operand.vmem [shape: f32[1,240], index: 3, kind: input, shape index: {}]
  %s4 = inlined_call_operand.vmem [shape: f32[1,224], index: 4, kind: input, shape index: {}]
  %s5 = inlined_call_operand.vmem [shape: bf16[224,48], index: 5, kind: input, shape index: {}]
  %s6 = inlined_call_operand.vmem [shape: bf16[224,40], index: 6, kind: input, shape index: {}]
  %s7 = inlined_call_operand.vmem [shape: f32[1,48], index: 7, kind: input, shape index: {}]
  %s8 = inlined_call_operand.vmem [shape: f32[1,40], index: 8, kind: input, shape index: {}]
  %s9 = inlined_call_operand.vmem [shape: bf16[40,8], index: 9, kind: input, shape index: {}]
  %s10 = inlined_call_operand.vmem [shape: f32[1,8], index: 10, kind: input, shape index: {}]
  %s11 = inlined_call_operand.vmem [shape: f32[80,8], index: 11, kind: input, shape index: {}]
  %s12 = inlined_call_operand.vmem [shape: f32[80,1], index: 12, kind: input, shape index: {}]
  %s13 = inlined_call_operand.vmem [shape: f32[40,80], index: 13, kind: input, shape index: {}]
  %s14 = inlined_call_operand.vmem [shape: f32[40,1], index: 14, kind: input, shape index: {}]
  %s15 = inlined_call_operand.vmem [shape: f32[1,40], index: 15, kind: input, shape index: {}]
  %s16 = inlined_call_operand.<no memory space> [shape: f32[1,1], index: 16, kind: input, shape index: {}]
  %s17 = inlined_call_operand.vmem [shape: f32[1,1,8], index: 17, kind: output, shape index: {}]
  %s18 = sld [smem:[#allocation0]]
  $region78: #{cnn_fog_forward.1} parent=0
    _
  %s20 = ssub.s32 1, %s18
  %s21 = scalar_select 0, %s20, %s18
  %v22 = vstv %s16
  %23 = vst [vmem:[#allocation2] sm:$0x1] %v22
  // Predicated region
  $region2: #{cnn_fog_forward.1} parent=0 // pred_check
    _
  $region3: #{cnn_fog_forward.1} parent=0 // pred_check_branch
    %25 = sbr.rel (0) target = $region5
  $region4: #{cnn_fog_forward.1} parent=0 // pred_region
    _
  $region5: #{cnn_fog_forward.1} parent=0 // pred_fallthru
    _
  // Predicated region
  $region6: #{cnn_fog_forward.1} parent=0 // pred_check
    _
  $region7: #{cnn_fog_forward.1} parent=0 // pred_check_branch
    %27 = sbr.rel (0) target = $region9
  $region8: #{cnn_fog_forward.1} parent=0 // pred_region
    _
  $region9: #{cnn_fog_forward.1} parent=0 // pred_fallthru
    _
  // Predicated region
  $region10: #{cnn_fog_forward.1} parent=0 // pred_check
    _
  $region11: #{cnn_fog_forward.1} parent=0 // pred_check_branch
    %29 = sbr.rel (0) target = $region13
  $region12: #{cnn_fog_forward.1} parent=0 // pred_region
    _
  $region13: #{cnn_fog_forward.1} parent=0 // pred_fallthru
    _
  // Predicated region
  $region14: #{cnn_fog_forward.1} parent=0 // pred_check
    _
  $region15: #{cnn_fog_forward.1} parent=0 // pred_check_branch
    %31 = sbr.rel (0) target = $region17
  $region16: #{cnn_fog_forward.1} parent=0 // pred_region
    _
  $region17: #{cnn_fog_forward.1} parent=0 // pred_fallthru
    _
  // Predicated region
  $region18: #{cnn_fog_forward.1} parent=0 // pred_check
    _
  $region19: #{cnn_fog_forward.1} parent=0 // pred_check_branch
    %33 = sbr.rel (0) target = $region21
  $region20: #{cnn_fog_forward.1} parent=0 // pred_region
    _
  $region21: #{cnn_fog_forward.1} parent=0 // pred_fallthru
    _
  // Predicated region
  $region22: #{cnn_fog_forward.1} parent=0 // pred_check
    _
  $region23: #{cnn_fog_forward.1} parent=0 // pred_check_branch
    %35 = sbr.rel (0) target = $region25
  $region24: #{cnn_fog_forward.1} parent=0 // pred_region
    _
  $region25: #{cnn_fog_forward.1} parent=0 // pred_fallthru
    _
  // Predicated region
  $region26: #{cnn_fog_forward.1} parent=0 // pred_check
    _
  $region27: #{cnn_fog_forward.1} parent=0 // pred_check_branch
    %37 = sbr.rel (0) target = $region29
  $region28: #{cnn_fog_forward.1} parent=0 // pred_region
    _
  $region29: #{cnn_fog_forward.1} parent=0 // pred_fallthru
    _
  // Predicated region
  $region30: #{cnn_fog_forward.1} parent=0 // pred_check
    _
  $region31: #{cnn_fog_forward.1} parent=0 // pred_check_branch
    %39 = sbr.rel (0) target = $region33
  $region32: #{cnn_fog_forward.1} parent=0 // pred_region
    _
  $region33: #{cnn_fog_forward.1} parent=0 // pred_fallthru
    _
  // Predicated region
  $region34: #{cnn_fog_forward.1} parent=0 // pred_check
    _
  $region35: #{cnn_fog_forward.1} parent=0 // pred_check_branch
    %41 = sbr.rel (0) target = $region37
  $region36: #{cnn_fog_forward.1} parent=0 // pred_region
    _
  $region37: #{cnn_fog_forward.1} parent=0 // pred_fallthru
    _
  // Predicated region
  $region38: #{cnn_fog_forward.1} parent=0 // pred_check
    _
  $region39: #{cnn_fog_forward.1} parent=0 // pred_check_branch
    %43 = sbr.rel (0) target = $region41
  $region40: #{cnn_fog_forward.1} parent=0 // pred_region
    _
  $region41: #{cnn_fog_forward.1} parent=0 // pred_fallthru
    _
  // Predicated region
  $region42: #{cnn_fog_forward.1} parent=0 // pred_check
    _
  $region43: #{cnn_fog_forward.1} parent=0 // pred_check_branch
    %45 = sbr.rel (0) target = $region45
  $region44: #{cnn_fog_forward.1} parent=0 // pred_region
    _
  $region45: #{cnn_fog_forward.1} parent=0 // pred_fallthru
    _
  // Predicated region
  $region46: #{cnn_fog_forward.1} parent=0 // pred_check
    _
  $region47: #{cnn_fog_forward.1} parent=0 // pred_check_branch
    %47 = sbr.rel (0) target = $region49
  $region48: #{cnn_fog_forward.1} parent=0 // pred_region
    _
  $region49: #{cnn_fog_forward.1} parent=0 // pred_fallthru
    _
  // Predicated region
  $region50: #{cnn_fog_forward.1} parent=0 // pred_check
    _
  $region51: #{cnn_fog_forward.1} parent=0 // pred_check_branch
    %49 = sbr.rel (0) target = $region53
  $region52: #{cnn_fog_forward.1} parent=0 // pred_region
    _
  $region53: #{cnn_fog_forward.1} parent=0 // pred_fallthru
    _
  // Predicated region
  $region54: #{cnn_fog_forward.1} parent=0 // pred_check
    _
  $region55: #{cnn_fog_forward.1} parent=0 // pred_check_branch
    %51 = sbr.rel (0) target = $region57
  $region56: #{cnn_fog_forward.1} parent=0 // pred_region
    _
  $region57: #{cnn_fog_forward.1} parent=0 // pred_fallthru
    _
  // Predicated region
  $region58: #{cnn_fog_forward.1} parent=0 // pred_check
    _
  $region59: #{cnn_fog_forward.1} parent=0 // pred_check_branch
    %53 = sbr.rel (0) target = $region61
  $region60: #{cnn_fog_forward.1} parent=0 // pred_region
    _
  $region61: #{cnn_fog_forward.1} parent=0 // pred_fallthru
    _
  // Predicated region
  $region62: #{cnn_fog_forward.1} parent=0 // pred_check
    _
  $region63: #{cnn_fog_forward.1} parent=0 // pred_check_branch
    %55 = sbr.rel (0) target = $region65
  $region64: #{cnn_fog_forward.1} parent=0 // pred_region
    _
  $region65: #{cnn_fog_forward.1} parent=0 // pred_fallthru
    _
  // Predicated region
  $region66: #{cnn_fog_forward.1} parent=0 // pred_check
    _
  $region67: #{cnn_fog_forward.1} parent=0 // pred_check_branch
    %57 = sbr.rel (0) target = $region69
  $region68: #{cnn_fog_forward.1} parent=0 // pred_region
    _
  $region69: #{cnn_fog_forward.1} parent=0 // pred_fallthru
    _
  %v59 = vld [vmem:[%s0] sm:$0xff]
  %v60 = vld [vmem:[%s0 + $0x8] sm:$0xff]
  %v61 = vld [vmem:[%s0 + $0x10] sm:$0xff]
  %v62 = vld [vmem:[%s0 + $0x18] sm:$0xff]
  %v63 = vld [vmem:[%s0 + $0x20] sm:$0xff]
  %v64 = vld [vmem:[%s0 + $0x28] sm:$0xff]
  %v65 = vld [vmem:[%s0 + $0x30] sm:$0xff]
  %v66 = vld [vmem:[%s0 + $0x38] sm:$0xff]
  %v67 = vpack.c.bf16 %v60, %v59
  %v68 = vpack.c.bf16 %v62, %v61
  %v69 = vpack.c.bf16 %v64, %v63
  %v70 = vpack.c.bf16 %v66, %v65
  %v71 = vld [vmem:[%s1] sm:$0xff]
  %v72 = vld [vmem:[%s1 + $0x8] sm:$0xff]
  %v73 = vld [vmem:[%s1 + $0x10] sm:$0xff]
  %v74 = vld [vmem:[%s1 + $0x18] sm:$0xff]
  %v75 = vld [vmem:[%s1 + $0x20] sm:$0xff]
  %v76 = vld [vmem:[%s1 + $0x28] sm:$0xff]
  %v77 = vld [vmem:[%s1 + $0x30] sm:$0xff]
  %v78 = vld [vmem:[%s1 + $0x38] sm:$0xff]
  %v79 = vld [vmem:[%s1 + $0x40] sm:$0xff]
  %v80 = vld [vmem:[%s1 + $0x48] sm:$0xff]
  %v81 = vld [vmem:[%s1 + $0x50] sm:$0xff]
  %v82 = vld [vmem:[%s1 + $0x58] sm:$0xff]
  %v83 = vld [vmem:[%s1 + $0x60] sm:$0xff]
  %v84 = vld [vmem:[%s1 + $0x68] sm:$0xff]
  %v85 = vld [vmem:[%s1 + $0x70] sm:$0xff]
  %v86 = vld [vmem:[%s1 + $0x78] sm:$0xff]
  %v87 = vld [vmem:[%s3] sm:$0x3]
  %v89 = vperm.slane %v87, 0
  %v90 = vperm.slane %v87, 1
  %v109 = vunpack.c.l.b16 %v71
  %v110 = vunpack.c.h.b16 %v71
  %v111 = vunpack.c.l.b16 %v72
  %v112 = vunpack.c.h.b16 %v72
  %v113 = vunpack.c.l.b16 %v73
  %v114 = vunpack.c.h.b16 %v73
  %v115 = vunpack.c.l.b16 %v74
  %v116 = vunpack.c.h.b16 %v74
  %v117 = vunpack.c.l.b16 %v75
  %v118 = vunpack.c.h.b16 %v75
  %v119 = vunpack.c.l.b16 %v76
  %v120 = vunpack.c.h.b16 %v76
  %v121 = vunpack.c.l.b16 %v77
  %v122 = vunpack.c.h.b16 %v77
  %v123 = vunpack.c.l.b16 %v78
  %v124 = vunpack.c.h.b16 %v78
  %v125 = vunpack.c.l.b16 %v79
  %v126 = vunpack.c.h.b16 %v79
  %v127 = vunpack.c.l.b16 %v80
  %v128 = vunpack.c.h.b16 %v80
  %v129 = vunpack.c.l.b16 %v81
  %v130 = vunpack.c.h.b16 %v81
  %v131 = vunpack.c.l.b16 %v82
  %v132 = vunpack.c.h.b16 %v82
  %v133 = vunpack.c.l.b16 %v83
  %v134 = vunpack.c.h.b16 %v83
  %v135 = vunpack.c.l.b16 %v84
  %v136 = vunpack.c.h.b16 %v84
  %v137 = vunpack.c.l.b16 %v85
  %v138 = vunpack.c.h.b16 %v85
  %v139 = vunpack.c.l.b16 %v86
  %v140 = vunpack.c.h.b16 %v86
  %v141 = vpack.c.b16 %v111, %v109
  %v142 = vpack.c.b16 %v112, %v110
  %v143 = vpack.c.b16 %v115, %v113
  %v144 = vpack.c.b16 %v116, %v114
  %v145 = vpack.c.b16 %v119, %v117
  %v146 = vpack.c.b16 %v120, %v118
  %v147 = vpack.c.b16 %v123, %v121
  %v148 = vpack.c.b16 %v124, %v122
  %v149 = vpack.c.b16 %v127, %v125
  %v150 = vpack.c.b16 %v128, %v126
  %v151 = vpack.c.b16 %v131, %v129
  %v152 = vpack.c.b16 %v132, %v130
  %v153 = vpack.c.b16 %v135, %v133
  %v154 = vpack.c.b16 %v136, %v134
  %v155 = vpack.c.b16 %v139, %v137
  %v156 = vpack.c.b16 %v140, %v138
  %173 = vmatpush.bf16.msra.mxu0 %v155
  %174 = vmatpush.bf16.msra.mxu0 %v153
  %175 = vmatpush.bf16.msra.mxu0 %v151
  %176 = vmatpush.bf16.msra.mxu0 %v149
  %177 = vmatpush.bf16.msra.mxu0 %v147
  %178 = vmatpush.bf16.msra.mxu0 %v145
  %179 = vmatpush.bf16.msra.mxu0 %v143
  %180 = vmatpush.bf16.msra.mxu0 %v141
  %181 = vmatmul.bf16.gmra.mxu0 %v67
  %v182 = vpop.f32.mrf.mxu0
  %v183 = vadd.f32 %v89, %v182
  %v184 = vpop.f32.mrf.mxu0
  %v185 = vadd.f32 %v89, %v184
  %186 = vmatmul.bf16.gmra.mxu0 %v68
  %v187 = vpop.f32.mrf.mxu0
  %v188 = vadd.f32 %v89, %v187
  %v189 = vpop.f32.mrf.mxu0
  %v190 = vadd.f32 %v89, %v189
  %191 = vmatmul.bf16.gmra.mxu0 %v69
  %v192 = vpop.f32.mrf.mxu0
  %v193 = vadd.f32 %v89, %v192
  %v194 = vpop.f32.mrf.mxu0
  %v195 = vadd.f32 %v89, %v194
  %196 = vmatmul.bf16.gmra.mxu0 %v70
  %v197 = vpop.f32.mrf.mxu0
  %v198 = vadd.f32 %v89, %v197
  %v199 = vpop.f32.mrf.mxu0
  %v200 = vadd.f32 %v89, %v199
  %201 = vdwg.mxu0
  %202 = vmatpush.bf16.msra.mxu0 %v156
  %203 = vmatpush.bf16.msra.mxu0 %v154
  %204 = vmatpush.bf16.msra.mxu0 %v152
  %205 = vmatpush.bf16.msra.mxu0 %v150
  %206 = vmatpush.bf16.msra.mxu0 %v148
  %207 = vmatpush.bf16.msra.mxu0 %v146
  %208 = vmatpush.bf16.msra.mxu0 %v144
  %209 = vmatpush.bf16.msra.mxu0 %v142
  %210 = vmatmul.bf16.gmra.mxu0 %v67
  %v211 = vpop.f32.mrf.mxu0
  %v212 = vadd.f32 %v90, %v211
  %v213 = vpop.f32.mrf.mxu0
  %v214 = vadd.f32 %v90, %v213
  %215 = vmatmul.bf16.gmra.mxu0 %v68
  %v216 = vpop.f32.mrf.mxu0
  %v217 = vadd.f32 %v90, %v216
  %v218 = vpop.f32.mrf.mxu0
  %v219 = vadd.f32 %v90, %v218
  %220 = vmatmul.bf16.gmra.mxu0 %v69
  %v221 = vpop.f32.mrf.mxu0
  %v222 = vadd.f32 %v90, %v221
  %v223 = vpop.f32.mrf.mxu0
  %v224 = vadd.f32 %v90, %v223
  %225 = vmatmul.bf16.gmra.mxu0 %v70
  %v226 = vpop.f32.mrf.mxu0
  %v227 = vadd.f32 %v90, %v226
  %v228 = vpop.f32.mrf.mxu0
  %v229 = vadd.f32 %v90, %v228
  %230 = vdwg.mxu0
  %v231 = vmax.f32 %v183, 0.0
  %v232 = vmax.f32 %v212, 0.0
  %v233 = vmax.f32 %v185, 0.0
  %v234 = vmax.f32 %v214, 0.0
  %v235 = vmax.f32 %v188, 0.0
  %v236 = vmax.f32 %v217, 0.0
  %v237 = vmax.f32 %v190, 0.0
  %v238 = vmax.f32 %v219, 0.0
  %v239 = vmax.f32 %v193, 0.0
  %v240 = vmax.f32 %v222, 0.0
  %v241 = vmax.f32 %v195, 0.0
  %v242 = vmax.f32 %v224, 0.0
  %v243 = vmax.f32 %v198, 0.0
  %v244 = vmax.f32 %v227, 0.0
  %v245 = vmax.f32 %v200, 0.0
  %v246 = vmax.f32 %v229, 0.0
  %v247 = vld [vmem:[%s2] sm:$0xff]
  %v248 = vld [vmem:[%s2 + $0x8] sm:$0xff]
  %v249 = vld [vmem:[%s2 + $0x10] sm:$0xff]
  %v250 = vld [vmem:[%s2 + $0x18] sm:$0xff]
  %v251 = vld [vmem:[%s2 + $0x20] sm:$0xff]
  %v252 = vld [vmem:[%s2 + $0x28] sm:$0xff]
  %v253 = vld [vmem:[%s2 + $0x30] sm:$0xff]
  %v254 = vld [vmem:[%s2 + $0x38] sm:$0xff]
  %v255 = vld [vmem:[%s2 + $0x40] sm:$0xff]
  %v256 = vld [vmem:[%s2 + $0x48] sm:$0xff]
  %v257 = vld [vmem:[%s2 + $0x50] sm:$0xff]
  %v258 = vld [vmem:[%s2 + $0x58] sm:$0xff]
  %v259 = vld [vmem:[%s2 + $0x60] sm:$0xff]
  %v260 = vld [vmem:[%s2 + $0x68] sm:$0xff]
  %v261 = vld [vmem:[%s2 + $0x70] sm:$0xff]
  %v262 = vld [vmem:[%s2 + $0x78] sm:$0xff]
  %v263 = vld [vmem:[%s4] sm:$0x3]
  %v265 = vperm.slane %v263, 0
  %v266 = vperm.slane %v263, 1
  %v285 = vunpack.c.l.b16 %v247
  %v286 = vunpack.c.h.b16 %v247
  %v287 = vunpack.c.l.b16 %v248
  %v288 = vunpack.c.h.b16 %v248
  %v289 = vunpack.c.l.b16 %v249
  %v290 = vunpack.c.h.b16 %v249
  %v291 = vunpack.c.l.b16 %v250
  %v292 = vunpack.c.h.b16 %v250
  %v293 = vunpack.c.l.b16 %v251
  %v294 = vunpack.c.h.b16 %v251
  %v295 = vunpack.c.l.b16 %v252
  %v296 = vunpack.c.h.b16 %v252
  %v297 = vunpack.c.l.b16 %v253
  %v298 = vunpack.c.h.b16 %v253
  %v299 = vunpack.c.l.b16 %v254
  %v300 = vunpack.c.h.b16 %v254
  %v301 = vunpack.c.l.b16 %v255
  %v302 = vunpack.c.h.b16 %v255
  %v303 = vunpack.c.l.b16 %v256
  %v304 = vunpack.c.h.b16 %v256
  %v305 = vunpack.c.l.b16 %v257
  %v306 = vunpack.c.h.b16 %v257
  %v307 = vunpack.c.l.b16 %v258
  %v308 = vunpack.c.h.b16 %v258
  %v309 = vunpack.c.l.b16 %v259
  %v310 = vunpack.c.h.b16 %v259
  %v311 = vunpack.c.l.b16 %v260
  %v312 = vunpack.c.h.b16 %v260
  %v313 = vunpack.c.l.b16 %v261
  %v314 = vunpack.c.h.b16 %v261
  %v315 = vunpack.c.l.b16 %v262
  %v316 = vunpack.c.h.b16 %v262
  %v317 = vpack.c.b16 %v287, %v285
  %v318 = vpack.c.b16 %v288, %v286
  %v319 = vpack.c.b16 %v291, %v289
  %v320 = vpack.c.b16 %v292, %v290
  %v321 = vpack.c.b16 %v295, %v293
  %v322 = vpack.c.b16 %v296, %v294
  %v323 = vpack.c.b16 %v299, %v297
  %v324 = vpack.c.b16 %v300, %v298
  %v325 = vpack.c.b16 %v303, %v301
  %v326 = vpack.c.b16 %v304, %v302
  %v327 = vpack.c.b16 %v307, %v305
  %v328 = vpack.c.b16 %v308, %v306
  %v329 = vpack.c.b16 %v311, %v309
  %v330 = vpack.c.b16 %v312, %v310
  %v331 = vpack.c.b16 %v315, %v313
  %v332 = vpack.c.b16 %v316, %v314
  %349 = vmatpush.bf16.msra.mxu0 %v331
  %350 = vmatpush.bf16.msra.mxu0 %v329
  %351 = vmatpush.bf16.msra.mxu0 %v327
  %352 = vmatpush.bf16.msra.mxu0 %v325
  %353 = vmatpush.bf16.msra.mxu0 %v323
  %354 = vmatpush.bf16.msra.mxu0 %v321
  %355 = vmatpush.bf16.msra.mxu0 %v319
  %356 = vmatpush.bf16.msra.mxu0 %v317
  %357 = vmatmul.bf16.gmra.mxu0 %v67
  %v358 = vpop.f32.mrf.mxu0
  %v359 = vadd.f32 %v265, %v358
  %v360 = vpop.f32.mrf.mxu0
  %v361 = vadd.f32 %v265, %v360
  %362 = vmatmul.bf16.gmra.mxu0 %v68
  %v363 = vpop.f32.mrf.mxu0
  %v364 = vadd.f32 %v265, %v363
  %v365 = vpop.f32.mrf.mxu0
  %v366 = vadd.f32 %v265, %v365
  %367 = vmatmul.bf16.gmra.mxu0 %v69
  %v368 = vpop.f32.mrf.mxu0
  %v369 = vadd.f32 %v265, %v368
  %v370 = vpop.f32.mrf.mxu0
  %v371 = vadd.f32 %v265, %v370
  %372 = vmatmul.bf16.gmra.mxu0 %v70
  %v373 = vpop.f32.mrf.mxu0
  %v374 = vadd.f32 %v265, %v373
  %v375 = vpop.f32.mrf.mxu0
  %v376 = vadd.f32 %v265, %v375
  %377 = vdwg.mxu0
  %378 = vmatpush.bf16.msra.mxu0 %v332
  %379 = vmatpush.bf16.msra.mxu0 %v330
  %380 = vmatpush.bf16.msra.mxu0 %v328
  %381 = vmatpush.bf16.msra.mxu0 %v326
  %382 = vmatpush.bf16.msra.mxu0 %v324
  %383 = vmatpush.bf16.msra.mxu0 %v322
  %384 = vmatpush.bf16.msra.mxu0 %v320
  %385 = vmatpush.bf16.msra.mxu0 %v318
  %386 = vmatmul.bf16.gmra.mxu0 %v67
  %v387 = vpop.f32.mrf.mxu0
  %v388 = vadd.f32 %v266, %v387
  %v389 = vpop.f32.mrf.mxu0
  %v390 = vadd.f32 %v266, %v389
  %391 = vmatmul.bf16.gmra.mxu0 %v68
  %v392 = vpop.f32.mrf.mxu0
  %v393 = vadd.f32 %v266, %v392
  %v394 = vpop.f32.mrf.mxu0
  %v395 = vadd.f32 %v266, %v394
  %396 = vmatmul.bf16.gmra.mxu0 %v69
  %v397 = vpop.f32.mrf.mxu0
  %v398 = vadd.f32 %v266, %v397
  %v399 = vpop.f32.mrf.mxu0
  %v400 = vadd.f32 %v266, %v399
  %401 = vmatmul.bf16.gmra.mxu0 %v70
  %v402 = vpop.f32.mrf.mxu0
  %v403 = vadd.f32 %v266, %v402
  %v404 = vpop.f32.mrf.mxu0
  %v405 = vadd.f32 %v266, %v404
  %406 = vdwg.mxu0
  %v407 = vmax.f32 %v359, 0.0
  %v408 = vmax.f32 %v388, 0.0
  %v409 = vmax.f32 %v361, 0.0
  %v410 = vmax.f32 %v390, 0.0
  %v411 = vmax.f32 %v364, 0.0
  %v412 = vmax.f32 %v393, 0.0
  %v413 = vmax.f32 %v366, 0.0
  %v414 = vmax.f32 %v395, 0.0
  %v415 = vmax.f32 %v369, 0.0
  %v416 = vmax.f32 %v398, 0.0
  %v417 = vmax.f32 %v371, 0.0
  %v418 = vmax.f32 %v400, 0.0
  %v419 = vmax.f32 %v374, 0.0
  %v420 = vmax.f32 %v403, 0.0
  %v421 = vmax.f32 %v376, 0.0
  %v422 = vmax.f32 %v405, 0.0
  %v423 = vmax.f32 %v231, %v407
  %v424 = vmax.f32 %v232, %v408
  %v425 = vmax.f32 %v233, %v409
  %v426 = vmax.f32 %v234, %v410
  %v427 = vmax.f32 %v235, %v411
  %v428 = vmax.f32 %v236, %v412
  %v429 = vmax.f32 %v237, %v413
  %v430 = vmax.f32 %v238, %v414
  %v431 = vmax.f32 %v239, %v415
  %v432 = vmax.f32 %v240, %v416
  %v433 = vmax.f32 %v241, %v417
  %v434 = vmax.f32 %v242, %v418
  %v435 = vmax.f32 %v243, %v419
  %v436 = vmax.f32 %v244, %v420
  %v437 = vmax.f32 %v245, %v421
  %v438 = vmax.f32 %v246, %v422
  %v439 = vpack.c.bf16 %v425, %v423
  %v440 = vpack.c.bf16 %v426, %v424
  %v441 = vpack.c.bf16 %v429, %v427
  %v442 = vpack.c.bf16 %v430, %v428
  %v443 = vpack.c.bf16 %v433, %v431
  %v444 = vpack.c.bf16 %v434, %v432
  %v445 = vpack.c.bf16 %v437, %v435
  %v446 = vpack.c.bf16 %v438, %v436
  %v447 = vld [vmem:[%s5] sm:$0xf]
  %v448 = vld [vmem:[%s5 + $0x4] sm:$0xf]
  %v449 = vld [vmem:[%s5 + $0x8] sm:$0xf]
  %v450 = vld [vmem:[%s5 + $0xc] sm:$0xf]
  %v451 = vld [vmem:[%s5 + $0x10] sm:$0xf]
  %v452 = vld [vmem:[%s5 + $0x14] sm:$0xf]
  %v453 = vld [vmem:[%s5 + $0x18] sm:$0xf]
  %v454 = vld [vmem:[%s5 + $0x1c] sm:$0xf]
  %v455 = vld [vmem:[%s5 + $0x20] sm:$0xf]
  %v456 = vld [vmem:[%s5 + $0x24] sm:$0xf]
  %v457 = vld [vmem:[%s5 + $0x28] sm:$0xf]
  %v458 = vld [vmem:[%s5 + $0x2c] sm:$0xf]
  %v459 = vld [vmem:[%s5 + $0x30] sm:$0xf]
  %v460 = vld [vmem:[%s5 + $0x34] sm:$0xf]
  %v461 = vld [vmem:[%s5 + $0x38] sm:$0xf]
  %v462 = vld [vmem:[%s5 + $0x3c] sm:$0xf]
  %v463 = vld [vmem:[%s5 + $0x40] sm:$0xf]
  %v464 = vld [vmem:[%s5 + $0x44] sm:$0xf]
  %v465 = vld [vmem:[%s5 + $0x48] sm:$0xf]
  %v466 = vld [vmem:[%s5 + $0x4c] sm:$0xf]
  %v467 = vld [vmem:[%s5 + $0x50] sm:$0xf]
  %v468 = vld [vmem:[%s5 + $0x54] sm:$0xf]
  %v469 = vld [vmem:[%s5 + $0x58] sm:$0xf]
  %v470 = vld [vmem:[%s5 + $0x5c] sm:$0xf]
  %v471 = vld [vmem:[%s5 + $0x60] sm:$0xf]
  %v472 = vld [vmem:[%s5 + $0x64] sm:$0xf]
  %v473 = vld [vmem:[%s5 + $0x68] sm:$0xf]
  %v474 = vld [vmem:[%s5 + $0x6c] sm:$0xf]
  %v475 = vld [vmem:[%s7] sm:$0x1]
  %v477 = vperm.slane %v475, 0
  %v507 = vunpack.c.l.b16 %v447
  %v508 = vunpack.c.l.b16 %v448
  %v509 = vunpack.c.l.b16 %v449
  %v510 = vunpack.c.l.b16 %v450
  %v511 = vunpack.c.l.b16 %v451
  %v512 = vunpack.c.l.b16 %v452
  %v513 = vunpack.c.l.b16 %v453
  %v514 = vunpack.c.l.b16 %v454
  %v515 = vunpack.c.l.b16 %v455
  %v516 = vunpack.c.l.b16 %v456
  %v517 = vunpack.c.l.b16 %v457
  %v518 = vunpack.c.l.b16 %v458
  %v519 = vunpack.c.l.b16 %v459
  %v520 = vunpack.c.l.b16 %v460
  %v521 = vunpack.c.l.b16 %v461
  %v522 = vunpack.c.l.b16 %v462
  %v523 = vunpack.c.l.b16 %v463
  %v524 = vunpack.c.l.b16 %v464
  %v525 = vunpack.c.l.b16 %v465
  %v526 = vunpack.c.l.b16 %v466
  %v527 = vunpack.c.l.b16 %v467
  %v528 = vunpack.c.l.b16 %v468
  %v529 = vunpack.c.l.b16 %v469
  %v530 = vunpack.c.l.b16 %v470
  %v531 = vunpack.c.l.b16 %v471
  %v532 = vunpack.c.l.b16 %v472
  %v533 = vunpack.c.l.b16 %v473
  %v534 = vunpack.c.l.b16 %v474
  %v535 = vpack.c.b16 %v508, %v507
  %v536 = vpack.c.b16 %v510, %v509
  %v537 = vpack.c.b16 %v512, %v511
  %v538 = vpack.c.b16 %v514, %v513
  %v539 = vpack.c.b16 %v516, %v515
  %v540 = vpack.c.b16 %v518, %v517
  %v541 = vpack.c.b16 %v520, %v519
  %v542 = vpack.c.b16 %v522, %v521
  %v543 = vpack.c.b16 %v524, %v523
  %v544 = vpack.c.b16 %v526, %v525
  %v545 = vpack.c.b16 %v528, %v527
  %v546 = vpack.c.b16 %v530, %v529
  %v547 = vpack.c.b16 %v532, %v531
  %v548 = vpack.c.b16 %v534, %v533
  %vm563 = vcmask 785408
  %v565 = vsel %vm563, %v440, 0
  %v568 = vsel %vm563, %v442, 0
  %v571 = vsel %vm563, %v444, 0
  %v574 = vsel %vm563, %v446, 0
  %576 = vmatpush.bf16.msra.mxu0 %v542
  %577 = vmatpush.bf16.msra.mxu0 %v541
  %578 = vmatpush.bf16.msra.mxu0 %v540
  %579 = vmatpush.bf16.msra.mxu0 %v539
  %580 = vmatpush.bf16.msra.mxu0 %v538
  %581 = vmatpush.bf16.msra.mxu0 %v537
  %582 = vmatpush.bf16.msra.mxu0 %v536
  %583 = vmatpush.bf16.msra.mxu0 %v535
  %584 = vmatmul.bf16.gmra.mxu0 %v439
  %v585 = vpop.f32.mrf.mxu0
  %v586 = vadd.f32 %v477, %v585
  %v587 = vpop.f32.mrf.mxu0
  %v588 = vadd.f32 %v477, %v587
  %589 = vmatmul.bf16.gmra.mxu0 %v441
  %v590 = vpop.f32.mrf.mxu0
  %v591 = vadd.f32 %v477, %v590
  %v592 = vpop.f32.mrf.mxu0
  %v593 = vadd.f32 %v477, %v592
  %594 = vmatmul.bf16.gmra.mxu0 %v443
  %v595 = vpop.f32.mrf.mxu0
  %v596 = vadd.f32 %v477, %v595
  %v597 = vpop.f32.mrf.mxu0
  %v598 = vadd.f32 %v477, %v597
  %599 = vmatmul.bf16.gmra.mxu0 %v445
  %v600 = vpop.f32.mrf.mxu0
  %v601 = vadd.f32 %v477, %v600
  %v602 = vpop.f32.mrf.mxu0
  %v603 = vadd.f32 %v477, %v602
  %604 = vdwg.mxu0
  %605 = vmatpush.bf16.msra.mxu0 0
  %606 = vmatpush.bf16.msra.mxu0 0
  %607 = vmatpush.bf16.msra.mxu0 %v548
  %608 = vmatpush.bf16.msra.mxu0 %v547
  %609 = vmatpush.bf16.msra.mxu0 %v546
  %610 = vmatpush.bf16.msra.mxu0 %v545
  %611 = vmatpush.bf16.msra.mxu0 %v544
  %612 = vmatpush.bf16.msra.mxu0 %v543
  %613 = vmatmul.bf16.gmra.mxu0 %v565
  %v614 = vpop.f32.mrf.mxu0
  %v615 = vadd.f32 %v586, %v614
  %v616 = vpop.f32.mrf.mxu0
  %v617 = vadd.f32 %v588, %v616
  %618 = vmatmul.bf16.gmra.mxu0 %v568
  %v619 = vpop.f32.mrf.mxu0
  %v620 = vadd.f32 %v591, %v619
  %v621 = vpop.f32.mrf.mxu0
  %v622 = vadd.f32 %v593, %v621
  %623 = vmatmul.bf16.gmra.mxu0 %v571
  %v624 = vpop.f32.mrf.mxu0
  %v625 = vadd.f32 %v596, %v624
  %v626 = vpop.f32.mrf.mxu0
  %v627 = vadd.f32 %v598, %v626
  %628 = vmatmul.bf16.gmra.mxu0 %v574
  %v629 = vpop.f32.mrf.mxu0
  %v630 = vadd.f32 %v601, %v629
  %v631 = vpop.f32.mrf.mxu0
  %v632 = vadd.f32 %v603, %v631
  %633 = vdwg.mxu0
  %v634 = vmax.f32 %v615, 0.0
  %v635 = vmax.f32 %v617, 0.0
  %v636 = vmax.f32 %v620, 0.0
  %v637 = vmax.f32 %v622, 0.0
  %v638 = vmax.f32 %v625, 0.0
  %v639 = vmax.f32 %v627, 0.0
  %v640 = vmax.f32 %v630, 0.0
  %v641 = vmax.f32 %v632, 0.0
  %v642 = vld [vmem:[%s6] sm:$0xf]
  %v643 = vld [vmem:[%s6 + $0x4] sm:$0xf]
  %v644 = vld [vmem:[%s6 + $0x8] sm:$0xf]
  %v645 = vld [vmem:[%s6 + $0xc] sm:$0xf]
  %v646 = vld [vmem:[%s6 + $0x10] sm:$0xf]
  %v647 = vld [vmem:[%s6 + $0x14] sm:$0xf]
  %v648 = vld [vmem:[%s6 + $0x18] sm:$0xf]
  %v649 = vld [vmem:[%s6 + $0x1c] sm:$0xf]
  %v650 = vld [vmem:[%s6 + $0x20] sm:$0xf]
  %v651 = vld [vmem:[%s6 + $0x24] sm:$0xf]
  %v652 = vld [vmem:[%s6 + $0x28] sm:$0xf]
  %v653 = vld [vmem:[%s6 + $0x2c] sm:$0xf]
  %v654 = vld [vmem:[%s6 + $0x30] sm:$0xf]
  %v655 = vld [vmem:[%s6 + $0x34] sm:$0xf]
  %v656 = vld [vmem:[%s6 + $0x38] sm:$0xf]
  %v657 = vld [vmem:[%s6 + $0x3c] sm:$0xf]
  %v658 = vld [vmem:[%s6 + $0x40] sm:$0xf]
  %v659 = vld [vmem:[%s6 + $0x44] sm:$0xf]
  %v660 = vld [vmem:[%s6 + $0x48] sm:$0xf]
  %v661 = vld [vmem:[%s6 + $0x4c] sm:$0xf]
  %v662 = vld [vmem:[%s6 + $0x50] sm:$0xf]
  %v663 = vld [vmem:[%s6 + $0x54] sm:$0xf]
  %v664 = vld [vmem:[%s6 + $0x58] sm:$0xf]
  %v665 = vld [vmem:[%s6 + $0x5c] sm:$0xf]
  %v666 = vld [vmem:[%s6 + $0x60] sm:$0xf]
  %v667 = vld [vmem:[%s6 + $0x64] sm:$0xf]
  %v668 = vld [vmem:[%s6 + $0x68] sm:$0xf]
  %v669 = vld [vmem:[%s6 + $0x6c] sm:$0xf]
  %v670 = vld [vmem:[%s8] sm:$0x1]
  %v672 = vperm.slane %v670, 0
  %v702 = vunpack.c.l.b16 %v642
  %v703 = vunpack.c.l.b16 %v643
  %v704 = vunpack.c.l.b16 %v644
  %v705 = vunpack.c.l.b16 %v645
  %v706 = vunpack.c.l.b16 %v646
  %v707 = vunpack.c.l.b16 %v647
  %v708 = vunpack.c.l.b16 %v648
  %v709 = vunpack.c.l.b16 %v649
  %v710 = vunpack.c.l.b16 %v650
  %v711 = vunpack.c.l.b16 %v651
  %v712 = vunpack.c.l.b16 %v652
  %v713 = vunpack.c.l.b16 %v653
  %v714 = vunpack.c.l.b16 %v654
  %v715 = vunpack.c.l.b16 %v655
  %v716 = vunpack.c.l.b16 %v656
  %v717 = vunpack.c.l.b16 %v657
  %v718 = vunpack.c.l.b16 %v658
  %v719 = vunpack.c.l.b16 %v659
  %v720 = vunpack.c.l.b16 %v660
  %v721 = vunpack.c.l.b16 %v661
  %v722 = vunpack.c.l.b16 %v662
  %v723 = vunpack.c.l.b16 %v663
  %v724 = vunpack.c.l.b16 %v664
  %v725 = vunpack.c.l.b16 %v665
  %v726 = vunpack.c.l.b16 %v666
  %v727 = vunpack.c.l.b16 %v667
  %v728 = vunpack.c.l.b16 %v668
  %v729 = vunpack.c.l.b16 %v669
  %v730 = vpack.c.b16 %v703, %v702
  %v731 = vpack.c.b16 %v705, %v704
  %v732 = vpack.c.b16 %v707, %v706
  %v733 = vpack.c.b16 %v709, %v708
  %v734 = vpack.c.b16 %v711, %v710
  %v735 = vpack.c.b16 %v713, %v712
  %v736 = vpack.c.b16 %v715, %v714
  %v737 = vpack.c.b16 %v717, %v716
  %v738 = vpack.c.b16 %v719, %v718
  %v739 = vpack.c.b16 %v721, %v720
  %v740 = vpack.c.b16 %v723, %v722
  %v741 = vpack.c.b16 %v725, %v724
  %v742 = vpack.c.b16 %v727, %v726
  %v743 = vpack.c.b16 %v729, %v728
  %758 = vmatpush.bf16.msra.mxu0 %v737
  %759 = vmatpush.bf16.msra.mxu0 %v736
  %760 = vmatpush.bf16.msra.mxu0 %v735
  %761 = vmatpush.bf16.msra.mxu0 %v734
  %762 = vmatpush.bf16.msra.mxu0 %v733
  %763 = vmatpush.bf16.msra.mxu0 %v732
  %764 = vmatpush.bf16.msra.mxu0 %v731
  %765 = vmatpush.bf16.msra.mxu0 %v730
  %766 = vmatmul.bf16.gmra.mxu0 %v439
  %v767 = vpop.f32.mrf.mxu0
  %v768 = vadd.f32 %v672, %v767
  %v769 = vpop.f32.mrf.mxu0
  %v770 = vadd.f32 %v672, %v769
  %771 = vmatmul.bf16.gmra.mxu0 %v441
  %v772 = vpop.f32.mrf.mxu0
  %v773 = vadd.f32 %v672, %v772
  %v774 = vpop.f32.mrf.mxu0
  %v775 = vadd.f32 %v672, %v774
  %776 = vmatmul.bf16.gmra.mxu0 %v443
  %v777 = vpop.f32.mrf.mxu0
  %v778 = vadd.f32 %v672, %v777
  %v779 = vpop.f32.mrf.mxu0
  %v780 = vadd.f32 %v672, %v779
  %781 = vmatmul.bf16.gmra.mxu0 %v445
  %v782 = vpop.f32.mrf.mxu0
  %v783 = vadd.f32 %v672, %v782
  %v784 = vpop.f32.mrf.mxu0
  %v785 = vadd.f32 %v672, %v784
  %786 = vdwg.mxu0
  %787 = vmatpush.bf16.msra.mxu0 0
  %788 = vmatpush.bf16.msra.mxu0 0
  %789 = vmatpush.bf16.msra.mxu0 %v743
  %790 = vmatpush.bf16.msra.mxu0 %v742
  %791 = vmatpush.bf16.msra.mxu0 %v741
  %792 = vmatpush.bf16.msra.mxu0 %v740
  %793 = vmatpush.bf16.msra.mxu0 %v739
  %794 = vmatpush.bf16.msra.mxu0 %v738
  %795 = vmatmul.bf16.gmra.mxu0 %v565
  %v796 = vpop.f32.mrf.mxu0
  %v797 = vadd.f32 %v768, %v796
  %v798 = vpop.f32.mrf.mxu0
  %v799 = vadd.f32 %v770, %v798
  %800 = vmatmul.bf16.gmra.mxu0 %v568
  %v801 = vpop.f32.mrf.mxu0
  %v802 = vadd.f32 %v773, %v801
  %v803 = vpop.f32.mrf.mxu0
  %v804 = vadd.f32 %v775, %v803
  %805 = vmatmul.bf16.gmra.mxu0 %v571
  %v806 = vpop.f32.mrf.mxu0
  %v807 = vadd.f32 %v778, %v806
  %v808 = vpop.f32.mrf.mxu0
  %v809 = vadd.f32 %v780, %v808
  %810 = vmatmul.bf16.gmra.mxu0 %v574
  %v811 = vpop.f32.mrf.mxu0
  %v812 = vadd.f32 %v783, %v811
  %v813 = vpop.f32.mrf.mxu0
  %v814 = vadd.f32 %v785, %v813
  %815 = vdwg.mxu0
  %v816 = vmax.f32 %v797, 0.0
  %v817 = vmax.f32 %v799, 0.0
  %v818 = vmax.f32 %v802, 0.0
  %v819 = vmax.f32 %v804, 0.0
  %v820 = vmax.f32 %v807, 0.0
  %v821 = vmax.f32 %v809, 0.0
  %v822 = vmax.f32 %v812, 0.0
  %v823 = vmax.f32 %v814, 0.0
  %v824 = vmax.f32 %v634, %v816
  %v825 = vmax.f32 %v635, %v817
  %v826 = vmax.f32 %v636, %v818
  %v827 = vmax.f32 %v637, %v819
  %v828 = vmax.f32 %v638, %v820
  %v829 = vmax.f32 %v639, %v821
  %v830 = vmax.f32 %v640, %v822
  %v831 = vmax.f32 %v641, %v823
  %v832 = vpack.c.bf16 %v825, %v824
  %v833 = vpack.c.bf16 %v827, %v826
  %v834 = vpack.c.bf16 %v829, %v828
  %v835 = vpack.c.bf16 %v831, %v830
  %v836 = vld [vmem:[%s9] sm:$0xf]
  %v837 = vld [vmem:[%s9 + $0x4] sm:$0xf]
  %v838 = vld [vmem:[%s9 + $0x8] sm:$0xf]
  %v839 = vld [vmem:[%s9 + $0xc] sm:$0xf]
  %v840 = vld [vmem:[%s9 + $0x10] sm:$0xf]
  %v841 = vld [vmem:[%s10] sm:$0x1]
  %v843 = vperm.slane %v841, 0
  %v850 = vunpack.c.l.b16 %v836
  %v851 = vunpack.c.l.b16 %v837
  %v852 = vunpack.c.l.b16 %v838
  %v853 = vunpack.c.l.b16 %v839
  %v854 = vunpack.c.l.b16 %v840
  %v855 = vpack.c.b16 %v851, %v850
  %v856 = vpack.c.b16 %v853, %v852
  %v857 = vpack.c.b16 %v854, %v854
  %vm860 = vcmask 326656
  %v862 = vsel %vm860, %v832, 0
  %v865 = vsel %vm860, %v833, 0
  %v868 = vsel %vm860, %v834, 0
  %v871 = vsel %vm860, %v835, 0
  %vm873 = vcmask 1043456
  %v875 = vsel %vm873, %v857, 0
  %877 = vmatpush.bf16.msra.mxu0 0
  %878 = vmatpush.bf16.msra.mxu0 0
  %879 = vmatpush.bf16.msra.mxu0 0
  %880 = vmatpush.bf16.msra.mxu0 0
  %881 = vmatpush.bf16.msra.mxu0 0
  %882 = vmatpush.bf16.msra.mxu0 %v875
  %883 = vmatpush.bf16.msra.mxu0 %v856
  %884 = vmatpush.bf16.msra.mxu0 %v855
  %885 = vmatmul.bf16.gmra.mxu0 %v862
  %v886 = vpop.f32.mrf.mxu0
  %v887 = vadd.f32 %v843, %v886
  %v888 = vpop.f32.mrf.mxu0
  %v889 = vadd.f32 %v843, %v888
  %890 = vmatmul.bf16.gmra.mxu0 %v865
  %v891 = vpop.f32.mrf.mxu0
  %v892 = vadd.f32 %v843, %v891
  %v893 = vpop.f32.mrf.mxu0
  %v894 = vadd.f32 %v843, %v893
  %895 = vmatmul.bf16.gmra.mxu0 %v868
  %v896 = vpop.f32.mrf.mxu0
  %v897 = vadd.f32 %v843, %v896
  %v898 = vpop.f32.mrf.mxu0
  %v899 = vadd.f32 %v843, %v898
  %900 = vmatmul.bf16.gmra.mxu0 %v871
  %v901 = vpop.f32.mrf.mxu0
  %v902 = vadd.f32 %v843, %v901
  %v903 = vpop.f32.mrf.mxu0
  %v904 = vadd.f32 %v843, %v903
  %905 = vdwg.mxu0
  %vm906 = vcmask 64512
  %v907 = vsel %vm906, %v887, 0.0
  %908 = vadd.xlane.f32.xlu0 %v907
  %v909 = vpop.xlane.xlu0 %908
  %v910 = vsel %vm906, %v889, 0.0
  %911 = vadd.xlane.f32.xlu0 %v910
  %v912 = vpop.xlane.xlu0 %911
  %v913 = vsel %vm906, %v892, 0.0
  %914 = vadd.xlane.f32.xlu0 %v913
  %v915 = vpop.xlane.xlu0 %914
  %v916 = vsel %vm906, %v894, 0.0
  %917 = vadd.xlane.f32.xlu0 %v916
  %v918 = vpop.xlane.xlu0 %917
  %v919 = vsel %vm906, %v897, 0.0
  %920 = vadd.xlane.f32.xlu0 %v919
  %v921 = vpop.xlane.xlu0 %920
  %v922 = vsel %vm906, %v899, 0.0
  %923 = vadd.xlane.f32.xlu0 %v922
  %v924 = vpop.xlane.xlu0 %923
  %v925 = vsel %vm906, %v902, 0.0
  %926 = vadd.xlane.f32.xlu0 %v925
  %v927 = vpop.xlane.xlu0 %926
  %v928 = vsel %vm906, %v904, 0.0
  %929 = vadd.xlane.f32.xlu0 %v928
  %v930 = vpop.xlane.xlu0 %929
  %v931 = vmul.f32 %v909, 0.125
  %v932 = vmul.f32 %v912, 0.125
  %v933 = vmul.f32 %v915, 0.125
  %v934 = vmul.f32 %v918, 0.125
  %v935 = vmul.f32 %v921, 0.125
  %v936 = vmul.f32 %v924, 0.125
  %v937 = vmul.f32 %v927, 0.125
  %v938 = vmul.f32 %v930, 0.125
  %v939 = vld [vmem:[%s11] sm:$0xff]
  %v940 = vld [vmem:[%s11 + $0x8] sm:$0xff]
  %v941 = vld [vmem:[%s11 + $0x10] sm:$0xff]
  %v942 = vld [vmem:[%s11 + $0x18] sm:$0xff]
  %v943 = vld [vmem:[%s11 + $0x20] sm:$0xff]
  %v944 = vld [vmem:[%s11 + $0x28] sm:$0xff]
  %v945 = vld [vmem:[%s11 + $0x30] sm:$0xff]
  %v946 = vld [vmem:[%s11 + $0x38] sm:$0xff]
  %v947 = vld [vmem:[%s11 + $0x40] sm:$0xff]
  %v948 = vld [vmem:[%s11 + $0x48] sm:$0xff]
  %v949 = vld [vmem:[%s12] sm:$0xff]
  %v950 = vld [vmem:[%s12 + $0x8] sm:$0xff]
  %v951 = vld [vmem:[%s12 + $0x10] sm:$0xff]
  %v952 = vld [vmem:[%s12 + $0x18] sm:$0xff]
  %v953 = vld [vmem:[%s12 + $0x20] sm:$0xff]
  %v954 = vld [vmem:[%s12 + $0x28] sm:$0xff]
  %v955 = vld [vmem:[%s12 + $0x30] sm:$0xff]
  %v956 = vld [vmem:[%s12 + $0x38] sm:$0xff]
  %v957 = vld [vmem:[%s12 + $0x40] sm:$0xff]
  %v958 = vld [vmem:[%s12 + $0x48] sm:$0xff]
  %960 = vset.pattern.permute.xlu0 0
  %961 = vperm.xlu0 %960, %v949
  %v962 = vpop.permute.xlu0 %961
  %965 = vset.pattern.permute.xlu0 0
  %966 = vperm.xlu0 %965, %v950
  %v967 = vpop.permute.xlu0 %966
  %970 = vset.pattern.permute.xlu0 0
  %971 = vperm.xlu0 %970, %v951
  %v972 = vpop.permute.xlu0 %971
  %975 = vset.pattern.permute.xlu0 0
  %976 = vperm.xlu0 %975, %v952
  %v977 = vpop.permute.xlu0 %976
  %980 = vset.pattern.permute.xlu0 0
  %981 = vperm.xlu0 %980, %v953
  %v982 = vpop.permute.xlu0 %981
  %985 = vset.pattern.permute.xlu0 0
  %986 = vperm.xlu0 %985, %v954
  %v987 = vpop.permute.xlu0 %986
  %990 = vset.pattern.permute.xlu0 0
  %991 = vperm.xlu0 %990, %v955
  %v992 = vpop.permute.xlu0 %991
  %995 = vset.pattern.permute.xlu0 0
  %996 = vperm.xlu0 %995, %v956
  %v997 = vpop.permute.xlu0 %996
  %1000 = vset.pattern.permute.xlu0 0
  %1001 = vperm.xlu0 %1000, %v957
  %v1002 = vpop.permute.xlu0 %1001
  %1005 = vset.pattern.permute.xlu0 0
  %1006 = vperm.xlu0 %1005, %v958
  %v1007 = vpop.permute.xlu0 %1006
  %v1017 = vlaneseq
  %v1018 = vand.u32 %v1017, 127
  %v1019 = vperm.slane %v931, %v1018
  %v1020 = vperm.slane %v932, %v1018
  %v1021 = vperm.slane %v933, %v1018
  %v1022 = vperm.slane %v934, %v1018
  %v1023 = vperm.slane %v935, %v1018
  %v1024 = vperm.slane %v936, %v1018
  %v1025 = vperm.slane %v937, %v1018
  %v1026 = vperm.slane %v938, %v1018
  %vm1027 = vcmask 1041409
  %v1028 = vsel %vm1027, %v1020, %v1019
  %vm1029 = vcmask 1042434
  %v1030 = vsel %vm1029, %v1021, %v1028
  %vm1031 = vcmask 1043459
  %v1032 = vsel %vm1031, %v1022, %v1030
  %vm1033 = vcmask 1044484
  %v1034 = vsel %vm1033, %v1023, %v1032
  %vm1035 = vcmask 1045509
  %v1036 = vsel %vm1035, %v1024, %v1034
  %vm1037 = vcmask 1046534
  %v1038 = vsel %vm1037, %v1025, %v1036
  %vm1039 = vcmask 1047559
  %v1040 = vsel %vm1039, %v1026, %v1038
  %v1042 = vsel %vm906, %v939, 0
  %v1045 = vsel %vm906, %v940, 0
  %v1048 = vsel %vm906, %v941, 0
  %v1051 = vsel %vm906, %v942, 0
  %v1054 = vsel %vm906, %v943, 0
  %v1057 = vsel %vm906, %v944, 0
  %v1060 = vsel %vm906, %v945, 0
  %v1063 = vsel %vm906, %v946, 0
  %v1066 = vsel %vm906, %v947, 0
  %v1069 = vsel %vm906, %v948, 0
  %v1071 = vsel %vm906, %v1040, 0
  %1073 = vmatpush.xpose.msra.mxu0 0.0
  %1074 = vmatpush.xpose.msra.mxu0 0.0
  %1075 = vmatpush.xpose.msra.mxu0 0.0
  %1076 = vmatpush.xpose.msra.mxu0 0.0
  %1077 = vmatpush.xpose.msra.mxu0 0.0
  %1078 = vmatpush.xpose.msra.mxu0 0.0
  %1079 = vmatpush.xpose.msra.mxu0 0.0
  %1080 = vmatpush.xpose.msra.mxu0 0.0
  %1081 = vmatpush.xpose.msra.mxu0 0.0
  %1082 = vmatpush.xpose.msra.mxu0 0.0
  %1083 = vmatpush.xpose.msra.mxu0 0.0
  %1084 = vmatpush.xpose.msra.mxu0 0.0
  %1085 = vmatpush.xpose.msra.mxu0 0.0
  %1086 = vmatpush.xpose.msra.mxu0 0.0
  %1087 = vmatpush.xpose.msra.mxu0 0.0
  %1088 = vmatpush.xpose.msra.mxu0 %v1071
  %1089 = vmatmul.f32.gmra.mxu0 %v1042
  %v1090 = vpop.f32.mrf.mxu0
  %v1091 = vadd.f32 %v962, %v1090
  %1092 = vmatmul.f32.gmra.mxu0 %v1045
  %v1093 = vpop.f32.mrf.mxu0
  %v1094 = vadd.f32 %v967, %v1093
  %1095 = vmatmul.f32.gmra.mxu0 %v1048
  %v1096 = vpop.f32.mrf.mxu0
  %v1097 = vadd.f32 %v972, %v1096
  %1098 = vmatmul.f32.gmra.mxu0 %v1051
  %v1099 = vpop.f32.mrf.mxu0
  %v1100 = vadd.f32 %v977, %v1099
  %1101 = vmatmul.f32.gmra.mxu0 %v1054
  %v1102 = vpop.f32.mrf.mxu0
  %v1103 = vadd.f32 %v982, %v1102
  %1104 = vmatmul.f32.gmra.mxu0 %v1057
  %v1105 = vpop.f32.mrf.mxu0
  %v1106 = vadd.f32 %v987, %v1105
  %1107 = vmatmul.f32.gmra.mxu0 %v1060
  %v1108 = vpop.f32.mrf.mxu0
  %v1109 = vadd.f32 %v992, %v1108
  %1110 = vmatmul.f32.gmra.mxu0 %v1063
  %v1111 = vpop.f32.mrf.mxu0
  %v1112 = vadd.f32 %v997, %v1111
  %1113 = vmatmul.f32.gmra.mxu0 %v1066
  %v1114 = vpop.f32.mrf.mxu0
  %v1115 = vadd.f32 %v1002, %v1114
  %1116 = vmatmul.f32.gmra.mxu0 %v1069
  %v1117 = vpop.f32.mrf.mxu0
  %v1118 = vadd.f32 %v1007, %v1117
  %1119 = vdwg.mxu0
  %v1120 = vmax.f32 %v1091, 0.0
  %v1121 = vmax.f32 %v1094, 0.0
  %v1122 = vmax.f32 %v1097, 0.0
  %v1123 = vmax.f32 %v1100, 0.0
  %v1124 = vmax.f32 %v1103, 0.0
  %v1125 = vmax.f32 %v1106, 0.0
  %v1126 = vmax.f32 %v1109, 0.0
  %v1127 = vmax.f32 %v1112, 0.0
  %v1128 = vmax.f32 %v1115, 0.0
  %v1129 = vmax.f32 %v1118, 0.0
  %v1130 = vld [vmem:[%s13] sm:$0xff]
  %v1131 = vld [vmem:[%s13 + $0x8] sm:$0xff]
  %v1132 = vld [vmem:[%s13 + $0x10] sm:$0xff]
  %v1133 = vld [vmem:[%s13 + $0x18] sm:$0xff]
  %v1134 = vld [vmem:[%s13 + $0x20] sm:$0xff]
  %v1135 = vld [vmem:[%s14] sm:$0xff]
  %v1136 = vld [vmem:[%s14 + $0x8] sm:$0xff]
  %v1137 = vld [vmem:[%s14 + $0x10] sm:$0xff]
  %v1138 = vld [vmem:[%s14 + $0x18] sm:$0xff]
  %v1139 = vld [vmem:[%s14 + $0x20] sm:$0xff]
  %1141 = vset.pattern.permute.xlu0 0
  %1142 = vperm.xlu0 %1141, %v1135
  %v1143 = vpop.permute.xlu0 %1142
  %1146 = vset.pattern.permute.xlu0 0
  %1147 = vperm.xlu0 %1146, %v1136
  %v1148 = vpop.permute.xlu0 %1147
  %1151 = vset.pattern.permute.xlu0 0
  %1152 = vperm.xlu0 %1151, %v1137
  %v1153 = vpop.permute.xlu0 %1152
  %1156 = vset.pattern.permute.xlu0 0
  %1157 = vperm.xlu0 %1156, %v1138
  %v1158 = vpop.permute.xlu0 %1157
  %1161 = vset.pattern.permute.xlu0 0
  %1162 = vperm.xlu0 %1161, %v1139
  %v1163 = vpop.permute.xlu0 %1162
  %vm1165 = vcmask 654336
  %v1167 = vsel %vm1165, %v1130, 0
  %v1170 = vsel %vm1165, %v1131, 0
  %v1173 = vsel %vm1165, %v1132, 0
  %v1176 = vsel %vm1165, %v1133, 0
  %v1179 = vsel %vm1165, %v1134, 0
  %1181 = vmatpush.msra.mxu0 0.0
  %1182 = vmatpush.msra.mxu0 0.0
  %1183 = vmatpush.msra.mxu0 0.0
  %1184 = vmatpush.msra.mxu0 0.0
  %1185 = vmatpush.msra.mxu0 0.0
  %1186 = vmatpush.msra.mxu0 0.0
  %1187 = vmatpush.msra.mxu0 %v1129
  %1188 = vmatpush.msra.mxu0 %v1128
  %1189 = vmatpush.msra.mxu0 %v1127
  %1190 = vmatpush.msra.mxu0 %v1126
  %1191 = vmatpush.msra.mxu0 %v1125
  %1192 = vmatpush.msra.mxu0 %v1124
  %1193 = vmatpush.msra.mxu0 %v1123
  %1194 = vmatpush.msra.mxu0 %v1122
  %1195 = vmatpush.msra.mxu0 %v1121
  %1196 = vmatpush.msra.mxu0 %v1120
  %1197 = vmatmul.f32.gmra.mxu0 %v1167
  %v1198 = vpop.f32.mrf.mxu0
  %v1199 = vadd.f32 %v1143, %v1198
  %1200 = vmatmul.f32.gmra.mxu0 %v1170
  %v1201 = vpop.f32.mrf.mxu0
  %v1202 = vadd.f32 %v1148, %v1201
  %1203 = vmatmul.f32.gmra.mxu0 %v1173
  %v1204 = vpop.f32.mrf.mxu0
  %v1205 = vadd.f32 %v1153, %v1204
  %1206 = vmatmul.f32.gmra.mxu0 %v1176
  %v1207 = vpop.f32.mrf.mxu0
  %v1208 = vadd.f32 %v1158, %v1207
  %1209 = vmatmul.f32.gmra.mxu0 %v1179
  %v1210 = vpop.f32.mrf.mxu0
  %v1211 = vadd.f32 %v1163, %v1210
  %1212 = vdwg.mxu0
  %v1213 = vmax.f32 %v1199, 0.0
  %v1214 = vmax.f32 %v1202, 0.0
  %v1215 = vmax.f32 %v1205, 0.0
  %v1216 = vmax.f32 %v1208, 0.0
  %v1217 = vmax.f32 %v1211, 0.0
  %v1218 = vld [vmem:[%s15] sm:$0x1]
  %v1219 = vld [vmem:[#allocation2] sm:$0x1]
  %1221 = vset.pattern.permute.xlu0 0
  %1222 = vperm.xlu0 %1221, %v1219
  %v1223 = vpop.permute.xlu0 %1222
  %v1225 = vperm.slane %v1223, 0
  %v1227 = vsel %vm860, %v1218, 0
  %1229 = vmatpush.msra.mxu0 0.0
  %1230 = vmatpush.msra.mxu0 0.0
  %1231 = vmatpush.msra.mxu0 0.0
  %1232 = vmatpush.msra.mxu0 0.0
  %1233 = vmatpush.msra.mxu0 0.0
  %1234 = vmatpush.msra.mxu0 0.0
  %1235 = vmatpush.msra.mxu0 0.0
  %1236 = vmatpush.msra.mxu0 0.0
  %1237 = vmatpush.msra.mxu0 0.0
  %1238 = vmatpush.msra.mxu0 0.0
  %1239 = vmatpush.msra.mxu0 0.0
  %1240 = vmatpush.msra.mxu0 %v1217
  %1241 = vmatpush.msra.mxu0 %v1216
  %1242 = vmatpush.msra.mxu0 %v1215
  %1243 = vmatpush.msra.mxu0 %v1214
  %1244 = vmatpush.msra.mxu0 %v1213
  %1245 = vmatmul.f32.gmra.mxu0 %v1227
  %v1246 = vpop.f32.mrf.mxu0
  %v1247 = vadd.f32 %v1225, %v1246
  %1248 = vdwg.mxu0
  %v1249 = vxor.u32 %v1247, 2147483648
  %v1250 = vmul.f32 %v1249, 1.442695
  %v1251 = vpow.pop %v1250
  %v1252 = vadd.f32 %v1251, 1.0
  %v1253 = vrcp.pop %v1252
  %v1254 = vmul.f32 %v1252, %v1253
  %v1255 = vsub.f32 1.0, %v1254
  %v1256 = vmul.f32 %v1253, %v1255
  %v1257 = vadd.f32 %v1253, %v1256
  %vm1258 = vweird.f32 %v1252
  %vm1259 = vweird.f32 %v1253
  %vm1260 = vmor %vm1258, %vm1259
  %v1261 = vsel %vm1260, %v1253, %v1257
  %v1262 = vand.u32 2147483647, %v1252
  %vm1263 = vcmp.eq.f32.partialorder %v1262, 8.507059e+37
  %v1264 = vand.u32 %v1252, 2147483648
  %v1265 = vor.u32 1.1754944e-38, %v1264
  %v1266 = vsel %vm1263, %v1265, %v1261
  %v1267 = vmul.f32 1.0, %v1266
  %vm1268 = vcmask 57344
  %1269 = vst.msk [vmem:[%s17] sm:$0x1] %vm1268, %v1267
  // Predicated region
  $region70: #{cnn_fog_forward.1} parent=0 // pred_check
    _
  $region71: #{cnn_fog_forward.1} parent=0 // pred_check_branch
    %1271 = sbr.rel (0) target = $region73
  $region72: #{cnn_fog_forward.1} parent=0 // pred_region
    _
  $region73: #{cnn_fog_forward.1} parent=0 // pred_fallthru
    _
  // Predicated region
  $region74: #{cnn_fog_forward.1} parent=0 // pred_check
    _
  $region75: #{cnn_fog_forward.1} parent=0 // pred_check_branch
    %1273 = sbr.rel (0) target = $region77
  $region76: #{cnn_fog_forward.1} parent=0 // pred_region
    _
  $region77: #{cnn_fog_forward.1} parent=0 // pred_fallthru
    _

</llo_original>
